<compile_context>
chip_gen: v5e
topology: v5e:2x2
jax: 0.10.0
libtpu: 0.0.40
codegen_flags: <defaults>
</compile_context>

<pallas_src>
import numpy as np

import jax
import jax.numpy as jnp
from jax import lax
from jax.experimental import pallas as pl
from jax.experimental.pallas import tpu as pltpu


# decoder layer configs: (kernel, padding, apply_tanh) -- last block has no nonlin
_DEC_CFG = [(4, 1, True), (4, 1, True), (3, 0, False)]

# conv kernel sizes for the 6 layers (3 encoder + 3 decoder)
_KSIZES = (3, 3, 3, 4, 4, 3)


# ------------------------------ fused kernel -------------------------------- #

def _cnn_fused_kernel(img_ref, wb_ref,
                      se12_ref, se23_ref, sfeat_ref,
                      sd01_ref, sd12_ref, sd23_ref,
                      feat_ref, pos_ref):
    """Whole CNN forward for ONE image; every activation stays in VMEM/vregs.

    Activation layout: [8, G*G] float32 -- channels (zero-padded to 8) on
    sublanes, flattened zero-padded / zero-dilated spatial grid (row-major) on
    the lane axis.
    """
    f32 = jnp.float32

    def shifted(a, s):
        # out[:, i] = a[:, i + s].  Invariant: the wrapped tail only ever lands
        # on grid positions that are never selected by the downstream sel
        # matrices (right/bottom padding rows of each grid).
        if s == 0:
            return a
        return jnp.concatenate([a[:, s:], a[:, :s]], axis=1)

    def conv(a, w, k, g):
        # One MXU dot over all k*k taps x 8 channels: [*, k*k*8] @ [k*k*8, L].
        taps = [shifted(a, ky * g + kx) for ky in range(k) for kx in range(k)]
        patches = jnp.concatenate(taps, axis=0)
        return jnp.dot(w, patches, preferred_element_type=f32)

    def pool2(z, g):
        # 2x2/2 max-pool on the raw conv grid; pooled value for output pixel
        # (p, q) lives at flat index (2p)*g + 2q (picked up by the sel matmul).
        return jnp.maximum(jnp.maximum(z, shifted(z, 1)),
                           jnp.maximum(shifted(z, g), shifted(z, g + 1)))

    def wgt(j, width):                       # layer-j conv weight  [8, k*k*8]
        return wb_ref[:, 128 * j:128 * j + width]

    def bias(j):                             # layer-j bias         [8, 1]
        return wb_ref[:, 768 + j:769 + j]

    def regrid(a, sel_ref):                  # gather/scatter as one-hot matmul
        return jnp.dot(a, sel_ref[...], preferred_element_type=f32)

    # --------------- encoder: 16x16x3 -> 8x8x4 -> 4x4x8 -> 2x2x8 -------------
    # bias is added before the regrid (a constant add commutes with max-pool);
    # tanh runs AFTER the down-select: tanh(0)=0 keeps the zero padding exact,
    # so no masking is needed and only consumed elements hit the EUP.
    a = img_ref[...]                                              # [8, 324]
    z = pool2(conv(a, wgt(0, 72), 3, 18), 18) + bias(0)           # [8, 324]
    a = jnp.tanh(regrid(z, se12_ref))                             # [8, 100]
    z = pool2(conv(a, wgt(1, 72), 3, 10), 10) + bias(1)           # [8, 100]
    a = jnp.tanh(regrid(z, se23_ref))                             # [8, 36]
    z = pool2(conv(a, wgt(2, 72), 3, 6), 6) + bias(2)             # [8, 36]
    feat = jnp.tanh(regrid(z, sfeat_ref))                         # [8, 4]
    feat_ref[...] = feat

    # --------------- decoder: 2x2x8 -> 4x4x8 -> 8x8x4 -> 17x17x1 -------------
    # decoder regrids UP-sample, so tanh stays on the (smaller) conv grid.
    d = regrid(feat, sd01_ref)                                    # [8, 49]
    d = regrid(jnp.tanh(conv(d, wgt(3, 128), 4, 7) + bias(3)), sd12_ref)    # [8, 121]
    d = regrid(jnp.tanh(conv(d, wgt(4, 128), 4, 11) + bias(4)), sd23_ref)   # [8, 361]
    # last layer: only output row 0 is real -> [1, 72] @ [72, 361]
    pos_ref[...] = conv(d, wb_ref[0:1, 640:712], 3, 19) + wb_ref[0:1, 773:774]


# ------------------------ host-side packing helpers -------------------------- #

def _sel_matrices():
    """Per-image one-hot f32 matrices for every layer-to-layer re-layout.

    sel[src, dst] = 1 selects flattened source position `src` into flattened
    destination position `dst`; all other destination positions become 0
    (exactly the zero padding / zero dilation the next conv expects).
    """

    def one_hot(n_src, n_dst, pairs):
        m = np.zeros((n_src, n_dst), np.float32)
        for src, dst in pairs:
            m[src, dst] = 1.0
        return m

    def pool_to_padded(g_src, g_dst, n):
        # pooled values at (2p)*g_src + 2q -> interior of next zero-padded grid
        return one_hot(g_src * g_src, g_dst * g_dst,
                       [(2 * p * g_src + 2 * q, (p + 1) * g_dst + (q + 1))
                        for p in range(n) for q in range(n)])

    def pool_to_compact(g_src, n):
        return one_hot(g_src * g_src, n * n,
                       [(2 * p * g_src + 2 * q, p * n + q)
                        for p in range(n) for q in range(n)])

    def image_to_dilated(src_stride, src_size, g_dst, n, pad):
        # n x n image (row stride src_stride in the source grid) ->
        # stride-2 zero-dilated + zero-padded g_dst x g_dst grid
        return one_hot(src_size, g_dst * g_dst,
                       [(p * src_stride + q, (2 * p + pad) * g_dst + (2 * q + pad))
                        for p in range(n) for q in range(n)])

    return (
        pool_to_padded(18, 10, 8),               # enc1 -> enc2   [324, 100]
        pool_to_padded(10, 6, 4),                # enc2 -> enc3   [100,  36]
        pool_to_compact(6, 2),                   # enc3 -> feat   [ 36,   4]
        image_to_dilated(2, 4, 7, 2, 2),         # feat -> dec1   [  4,  49]
        image_to_dilated(7, 49, 11, 4, 2),       # dec1 -> dec2   [ 49, 121]
        image_to_dilated(11, 121, 19, 8, 2),     # dec2 -> dec3   [121, 361]
    )


def _pack_weights(params):
    """All 6 conv weights + biases into one [8, 896] f32 slab.

    Column band j (128j : 128j + k*k*8) holds layer j's matmul weight
    [8 out-ch (padded), k*k*8 taps*in-ch]; column 768+j holds its bias.
    """
    wb = jnp.zeros((8, 896), jnp.float32)
    layers = params["encoder"] + params["decoder"]
    for j, ((w, b), k) in enumerate(zip(layers, _KSIZES)):
        cin, cout = w.shape[2], w.shape[3]
        wp = jnp.zeros((k, k, 8, 8), jnp.float32).at[:, :, :cin, :cout].set(w)
        wb = wb.at[:, 128 * j:128 * j + k * k * 8].set(wp.reshape(k * k * 8, 8).T)
        wb = wb.at[:cout, 768 + j].set(b)
    return wb


# ------------------------------ public forward ------------------------------- #

def cnn_forward(params, image_nchw):
    """Matches CNN.forward for this config: {"Features": enc, "PosMap": dec} (NCHW)."""
    B, C = image_nchw.shape[0], image_nchw.shape[1]

    # image: NCHW -> channel-padded(8), zero-padded(1), flattened [B, 8, 18*18]
    x = image_nchw.astype(jnp.float32)
    xp = jnp.pad(x, ((0, 0), (0, 8 - C), (1, 1), (1, 1)))
    img = xp.reshape(B, 8, 18 * 18)

    wb = _pack_weights(params)
    sels = [jnp.asarray(s) for s in _sel_matrices()]

    const = lambda b: (0, 0)
    feat, pos = pl.pallas_call(
        _cnn_fused_kernel,
        grid=(B,),
        in_specs=[pl.BlockSpec((None, 8, 324), lambda b: (b, 0, 0)),
                  pl.BlockSpec((8, 896), const)]
                 + [pl.BlockSpec(s.shape, const) for s in sels],
        out_specs=(pl.BlockSpec((None, 8, 4), lambda b: (b, 0, 0)),
                   pl.BlockSpec((None, 1, 361), lambda b: (b, 0, 0))),
        out_shape=(jax.ShapeDtypeStruct((B, 8, 4), jnp.float32),
                   jax.ShapeDtypeStruct((B, 1, 361), jnp.float32)),
        compiler_params=pltpu.CompilerParams(dimension_semantics=("parallel",)),
        cost_estimate=pl.CostEstimate(flops=B * 2_400_000,
                                      transcendentals=B * 2_500,
                                      bytes_accessed=400_000 + B * 12_000),
    )(img, wb, *sels)

    features = feat.reshape(B, 8, 2, 2)                              # [B,8,2,2]
    posmap = pos.reshape(B, 19, 19)[:, :17, :17][:, None, :, :]      # [B,1,17,17]
    return {"Features": features, "PosMap": posmap}


# -------------------- pure-JAX reference (for validation) -------------------- #

def cnn_reference(params, image_nchw):
    x = jnp.transpose(image_nchw, (0, 2, 3, 1)).astype(jnp.float32)
    dn = ("NHWC", "HWIO", "NHWC")
    for (w, b) in params["encoder"]:
        y = lax.conv_general_dilated(x, w, (1, 1), ((1, 1), (1, 1)),
                                     dimension_numbers=dn)
        y = jnp.tanh(y + b)
        x = lax.reduce_window(y, -jnp.inf, lax.max, (1, 2, 2, 1), (1, 2, 2, 1),
                              "VALID")
    enc = x
    d = enc
    for (w, b), (k, pad, tanh_on) in zip(params["decoder"], _DEC_CFG):
        pp = k - 1 - pad
        d = lax.conv_general_dilated(d, w, (1, 1), ((pp, pp), (pp, pp)),
                                     lhs_dilation=(2, 2), dimension_numbers=dn)
        d = d + b
        if tanh_on:
            d = jnp.tanh(d)
    return {"Features": jnp.transpose(enc, (0, 3, 1, 2)),
            "PosMap": jnp.transpose(d, (0, 3, 1, 2))}


# ------------------------------ parameters ----------------------------------- #

def init_params(key):
    def xavier(k, shape):  # shape = (kh, kw, cin, cout)
        fan_in = shape[0] * shape[1] * shape[2]
        fan_out = shape[0] * shape[1] * shape[3]
        lim = (6.0 / (fan_in + fan_out)) ** 0.5
        return jax.random.uniform(k, shape, jnp.float32, -lim, lim)

    enc_shapes = [(3, 3, 3, 4), (3, 3, 4, 8), (3, 3, 8, 8)]
    dec_shapes = [(4, 4, 8, 8), (4, 4, 8, 4), (3, 3, 4, 1)]
    keys = jax.random.split(key, len(enc_shapes) + len(dec_shapes))
    enc = [(xavier(keys[i], s), jnp.full((s[-1],), 0.01, jnp.float32))
           for i, s in enumerate(enc_shapes)]
    dec = [(xavier(keys[len(enc_shapes) + i], s),
            jnp.full((s[-1],), 0.01, jnp.float32))
           for i, s in enumerate(dec_shapes)]
    return {"encoder": enc, "decoder": dec}


# --------------------------------- main --------------------------------------- #

if __name__ == "__main__":
    key = jax.random.PRNGKey(0)
    k_img, k_par = jax.random.split(key)
    image = jax.random.normal(k_img, (2, 3, 16, 16), jnp.float32)   # NCHW
    params = init_params(k_par)

    out = jax.jit(cnn_forward)(params, image)
    out = jax.tree_util.tree_map(jax.block_until_ready, out)

    ref = cnn_reference(params, image)

    assert out["Features"].shape == (2, 8, 2, 2), out["Features"].shape
    assert out["PosMap"].shape == (2, 1, 17, 17), out["PosMap"].shape
    assert jnp.allclose(out["Features"], ref["Features"], atol=2e-3, rtol=2e-3)
    assert jnp.allclose(out["PosMap"], ref["PosMap"], atol=2e-3, rtol=2e-3)

    print("KERNEL_OK")
</pallas_src>

<mosaic_0001>
module attributes {stable_mosaic.version = 11 : i64} {
  func.func @_cnn_fused_kernel(%arg0: i32, %arg1: memref<1x8x324xf32, #tpu.memory_space<vmem>>, %arg2: memref<8x896xf32, #tpu.memory_space<vmem>>, %arg3: memref<324x100xf32, #tpu.memory_space<vmem>>, %arg4: memref<100x36xf32, #tpu.memory_space<vmem>>, %arg5: memref<36x4xf32, #tpu.memory_space<vmem>>, %arg6: memref<4x49xf32, #tpu.memory_space<vmem>>, %arg7: memref<49x121xf32, #tpu.memory_space<vmem>>, %arg8: memref<121x361xf32, #tpu.memory_space<vmem>>, %arg9: memref<1x8x4xf32, #tpu.memory_space<vmem>>, %arg10: memref<1x1x361xf32, #tpu.memory_space<vmem>>) attributes {dimension_semantics = [#tpu.dimension_semantics<parallel>], iteration_bounds = array<i64: 2>, scalar_prefetch = 0 : i64, scratch_operands = 0 : i64, tpu.core_type = #tpu.core_type<tc>, window_params = [{transform_indices = @transform_0, window_bounds = array<i64: 1, 8, 324>}, {pipeline_mode = #tpu.pipeline_mode<synchronous>, transform_indices = @transform_1, window_bounds = array<i64: 8, 896>}, {pipeline_mode = #tpu.pipeline_mode<synchronous>, transform_indices = @transform_2, window_bounds = array<i64: 324, 100>}, {pipeline_mode = #tpu.pipeline_mode<synchronous>, transform_indices = @transform_3, window_bounds = array<i64: 100, 36>}, {pipeline_mode = #tpu.pipeline_mode<synchronous>, transform_indices = @transform_4, window_bounds = array<i64: 36, 4>}, {pipeline_mode = #tpu.pipeline_mode<synchronous>, transform_indices = @transform_5, window_bounds = array<i64: 4, 49>}, {pipeline_mode = #tpu.pipeline_mode<synchronous>, transform_indices = @transform_6, window_bounds = array<i64: 49, 121>}, {pipeline_mode = #tpu.pipeline_mode<synchronous>, transform_indices = @transform_7, window_bounds = array<i64: 121, 361>}, {transform_indices = @transform_8, window_bounds = array<i64: 1, 8, 4>}, {transform_indices = @transform_9, window_bounds = array<i64: 1, 1, 361>}]} {
    %c0 = arith.constant 0 : index
    %c0_0 = arith.constant 0 : index
    %c0_1 = arith.constant 0 : index
    %0 = vector.load %arg1[%c0, %c0_0, %c0_1] : memref<1x8x324xf32, #tpu.memory_space<vmem>>, vector<1x8x324xf32>
    %1 = vector.shape_cast %0 : vector<1x8x324xf32> to vector<8x324xf32>
    %c0_2 = arith.constant 0 : index
    %c0_3 = arith.constant 0 : index
    %2 = vector.load %arg2[%c0_2, %c0_3] : memref<8x896xf32, #tpu.memory_space<vmem>>, vector<8x72xf32>
    %3 = vector.extract_strided_slice %1 {offsets = [0, 1], sizes = [8, 323], strides = [1, 1]} : vector<8x324xf32> to vector<8x323xf32>
    %4 = vector.extract_strided_slice %1 {offsets = [0, 0], sizes = [8, 1], strides = [1, 1]} : vector<8x324xf32> to vector<8x1xf32>
    %5 = tpu.concatenate %3, %4 in 1 : vector<8x323xf32>, vector<8x1xf32> -> vector<8x324xf32>
    %6 = vector.extract_strided_slice %1 {offsets = [0, 2], sizes = [8, 322], strides = [1, 1]} : vector<8x324xf32> to vector<8x322xf32>
    %7 = vector.extract_strided_slice %1 {offsets = [0, 0], sizes = [8, 2], strides = [1, 1]} : vector<8x324xf32> to vector<8x2xf32>
    %8 = tpu.concatenate %6, %7 in 1 : vector<8x322xf32>, vector<8x2xf32> -> vector<8x324xf32>
    %9 = vector.extract_strided_slice %1 {offsets = [0, 18], sizes = [8, 306], strides = [1, 1]} : vector<8x324xf32> to vector<8x306xf32>
    %10 = vector.extract_strided_slice %1 {offsets = [0, 0], sizes = [8, 18], strides = [1, 1]} : vector<8x324xf32> to vector<8x18xf32>
    %11 = tpu.concatenate %9, %10 in 1 : vector<8x306xf32>, vector<8x18xf32> -> vector<8x324xf32>
    %12 = vector.extract_strided_slice %1 {offsets = [0, 19], sizes = [8, 305], strides = [1, 1]} : vector<8x324xf32> to vector<8x305xf32>
    %13 = vector.extract_strided_slice %1 {offsets = [0, 0], sizes = [8, 19], strides = [1, 1]} : vector<8x324xf32> to vector<8x19xf32>
    %14 = tpu.concatenate %12, %13 in 1 : vector<8x305xf32>, vector<8x19xf32> -> vector<8x324xf32>
    %15 = vector.extract_strided_slice %1 {offsets = [0, 20], sizes = [8, 304], strides = [1, 1]} : vector<8x324xf32> to vector<8x304xf32>
    %16 = vector.extract_strided_slice %1 {offsets = [0, 0], sizes = [8, 20], strides = [1, 1]} : vector<8x324xf32> to vector<8x20xf32>
    %17 = tpu.concatenate %15, %16 in 1 : vector<8x304xf32>, vector<8x20xf32> -> vector<8x324xf32>
    %18 = vector.extract_strided_slice %1 {offsets = [0, 36], sizes = [8, 288], strides = [1, 1]} : vector<8x324xf32> to vector<8x288xf32>
    %19 = vector.extract_strided_slice %1 {offsets = [0, 0], sizes = [8, 36], strides = [1, 1]} : vector<8x324xf32> to vector<8x36xf32>
    %20 = tpu.concatenate %18, %19 in 1 : vector<8x288xf32>, vector<8x36xf32> -> vector<8x324xf32>
    %21 = vector.extract_strided_slice %1 {offsets = [0, 37], sizes = [8, 287], strides = [1, 1]} : vector<8x324xf32> to vector<8x287xf32>
    %22 = vector.extract_strided_slice %1 {offsets = [0, 0], sizes = [8, 37], strides = [1, 1]} : vector<8x324xf32> to vector<8x37xf32>
    %23 = tpu.concatenate %21, %22 in 1 : vector<8x287xf32>, vector<8x37xf32> -> vector<8x324xf32>
    %24 = vector.extract_strided_slice %1 {offsets = [0, 38], sizes = [8, 286], strides = [1, 1]} : vector<8x324xf32> to vector<8x286xf32>
    %25 = vector.extract_strided_slice %1 {offsets = [0, 0], sizes = [8, 38], strides = [1, 1]} : vector<8x324xf32> to vector<8x38xf32>
    %26 = tpu.concatenate %24, %25 in 1 : vector<8x286xf32>, vector<8x38xf32> -> vector<8x324xf32>
    %27 = tpu.concatenate %1, %5, %8, %11, %14, %17, %20, %23, %26 in 0 : vector<8x324xf32>, vector<8x324xf32>, vector<8x324xf32>, vector<8x324xf32>, vector<8x324xf32>, vector<8x324xf32>, vector<8x324xf32>, vector<8x324xf32>, vector<8x324xf32> -> vector<72x324xf32>
    %cst = arith.constant dense<0.000000e+00> : vector<8x324xf32>
    %28 = tpu.matmul %2, %27, %cst {dimension_numbers = #tpu.dot_dimension_numbers<[1], [0], [0], [1], [0, 0, 1, 1], [], []>} : vector<8x72xf32>, vector<72x324xf32>, vector<8x324xf32> -> vector<8x324xf32>
    %29 = vector.extract_strided_slice %28 {offsets = [0, 1], sizes = [8, 323], strides = [1, 1]} : vector<8x324xf32> to vector<8x323xf32>
    %30 = vector.extract_strided_slice %28 {offsets = [0, 0], sizes = [8, 1], strides = [1, 1]} : vector<8x324xf32> to vector<8x1xf32>
    %31 = tpu.concatenate %29, %30 in 1 : vector<8x323xf32>, vector<8x1xf32> -> vector<8x324xf32>
    %32 = arith.maximumf %28, %31 : vector<8x324xf32>
    %33 = vector.extract_strided_slice %28 {offsets = [0, 18], sizes = [8, 306], strides = [1, 1]} : vector<8x324xf32> to vector<8x306xf32>
    %34 = vector.extract_strided_slice %28 {offsets = [0, 0], sizes = [8, 18], strides = [1, 1]} : vector<8x324xf32> to vector<8x18xf32>
    %35 = tpu.concatenate %33, %34 in 1 : vector<8x306xf32>, vector<8x18xf32> -> vector<8x324xf32>
    %36 = vector.extract_strided_slice %28 {offsets = [0, 19], sizes = [8, 305], strides = [1, 1]} : vector<8x324xf32> to vector<8x305xf32>
    %37 = vector.extract_strided_slice %28 {offsets = [0, 0], sizes = [8, 19], strides = [1, 1]} : vector<8x324xf32> to vector<8x19xf32>
    %38 = tpu.concatenate %36, %37 in 1 : vector<8x305xf32>, vector<8x19xf32> -> vector<8x324xf32>
    %39 = arith.maximumf %35, %38 : vector<8x324xf32>
    %40 = arith.maximumf %32, %39 : vector<8x324xf32>
    %c0_4 = arith.constant 0 : index
    %c768 = arith.constant 768 : index
    %41 = vector.load %arg2[%c0_4, %c768] : memref<8x896xf32, #tpu.memory_space<vmem>>, vector<8x1xf32>
    %42 = vector.broadcast %41 : vector<8x1xf32> to vector<8x324xf32>
    %43 = arith.addf %40, %42 : vector<8x324xf32>
    %c0_5 = arith.constant 0 : index
    %c0_6 = arith.constant 0 : index
    %44 = vector.load %arg3[%c0_5, %c0_6] : memref<324x100xf32, #tpu.memory_space<vmem>>, vector<324x100xf32>
    %cst_7 = arith.constant dense<0.000000e+00> : vector<8x100xf32>
    %45 = tpu.matmul %43, %44, %cst_7 {dimension_numbers = #tpu.dot_dimension_numbers<[1], [0], [0], [1], [0, 0, 1, 1], [], []>} : vector<8x324xf32>, vector<324x100xf32>, vector<8x100xf32> -> vector<8x100xf32>
    %46 = math.tanh %45 : vector<8x100xf32>
    %c0_8 = arith.constant 0 : index
    %c128 = arith.constant 128 : index
    %47 = vector.load %arg2[%c0_8, %c128] : memref<8x896xf32, #tpu.memory_space<vmem>>, vector<8x72xf32>
    %48 = vector.extract_strided_slice %46 {offsets = [0, 1], sizes = [8, 99], strides = [1, 1]} : vector<8x100xf32> to vector<8x99xf32>
    %49 = vector.extract_strided_slice %46 {offsets = [0, 0], sizes = [8, 1], strides = [1, 1]} : vector<8x100xf32> to vector<8x1xf32>
    %50 = tpu.concatenate %48, %49 in 1 : vector<8x99xf32>, vector<8x1xf32> -> vector<8x100xf32>
    %51 = vector.extract_strided_slice %46 {offsets = [0, 2], sizes = [8, 98], strides = [1, 1]} : vector<8x100xf32> to vector<8x98xf32>
    %52 = vector.extract_strided_slice %46 {offsets = [0, 0], sizes = [8, 2], strides = [1, 1]} : vector<8x100xf32> to vector<8x2xf32>
    %53 = tpu.concatenate %51, %52 in 1 : vector<8x98xf32>, vector<8x2xf32> -> vector<8x100xf32>
    %54 = vector.extract_strided_slice %46 {offsets = [0, 10], sizes = [8, 90], strides = [1, 1]} : vector<8x100xf32> to vector<8x90xf32>
    %55 = vector.extract_strided_slice %46 {offsets = [0, 0], sizes = [8, 10], strides = [1, 1]} : vector<8x100xf32> to vector<8x10xf32>
    %56 = tpu.concatenate %54, %55 in 1 : vector<8x90xf32>, vector<8x10xf32> -> vector<8x100xf32>
    %57 = vector.extract_strided_slice %46 {offsets = [0, 11], sizes = [8, 89], strides = [1, 1]} : vector<8x100xf32> to vector<8x89xf32>
    %58 = vector.extract_strided_slice %46 {offsets = [0, 0], sizes = [8, 11], strides = [1, 1]} : vector<8x100xf32> to vector<8x11xf32>
    %59 = tpu.concatenate %57, %58 in 1 : vector<8x89xf32>, vector<8x11xf32> -> vector<8x100xf32>
    %60 = vector.extract_strided_slice %46 {offsets = [0, 12], sizes = [8, 88], strides = [1, 1]} : vector<8x100xf32> to vector<8x88xf32>
    %61 = vector.extract_strided_slice %46 {offsets = [0, 0], sizes = [8, 12], strides = [1, 1]} : vector<8x100xf32> to vector<8x12xf32>
    %62 = tpu.concatenate %60, %61 in 1 : vector<8x88xf32>, vector<8x12xf32> -> vector<8x100xf32>
    %63 = vector.extract_strided_slice %46 {offsets = [0, 20], sizes = [8, 80], strides = [1, 1]} : vector<8x100xf32> to vector<8x80xf32>
    %64 = vector.extract_strided_slice %46 {offsets = [0, 0], sizes = [8, 20], strides = [1, 1]} : vector<8x100xf32> to vector<8x20xf32>
    %65 = tpu.concatenate %63, %64 in 1 : vector<8x80xf32>, vector<8x20xf32> -> vector<8x100xf32>
    %66 = vector.extract_strided_slice %46 {offsets = [0, 21], sizes = [8, 79], strides = [1, 1]} : vector<8x100xf32> to vector<8x79xf32>
    %67 = vector.extract_strided_slice %46 {offsets = [0, 0], sizes = [8, 21], strides = [1, 1]} : vector<8x100xf32> to vector<8x21xf32>
    %68 = tpu.concatenate %66, %67 in 1 : vector<8x79xf32>, vector<8x21xf32> -> vector<8x100xf32>
    %69 = vector.extract_strided_slice %46 {offsets = [0, 22], sizes = [8, 78], strides = [1, 1]} : vector<8x100xf32> to vector<8x78xf32>
    %70 = vector.extract_strided_slice %46 {offsets = [0, 0], sizes = [8, 22], strides = [1, 1]} : vector<8x100xf32> to vector<8x22xf32>
    %71 = tpu.concatenate %69, %70 in 1 : vector<8x78xf32>, vector<8x22xf32> -> vector<8x100xf32>
    %72 = tpu.concatenate %46, %50, %53, %56, %59, %62, %65, %68, %71 in 0 : vector<8x100xf32>, vector<8x100xf32>, vector<8x100xf32>, vector<8x100xf32>, vector<8x100xf32>, vector<8x100xf32>, vector<8x100xf32>, vector<8x100xf32>, vector<8x100xf32> -> vector<72x100xf32>
    %cst_9 = arith.constant dense<0.000000e+00> : vector<8x100xf32>
    %73 = tpu.matmul %47, %72, %cst_9 {dimension_numbers = #tpu.dot_dimension_numbers<[1], [0], [0], [1], [0, 0, 1, 1], [], []>} : vector<8x72xf32>, vector<72x100xf32>, vector<8x100xf32> -> vector<8x100xf32>
    %74 = vector.extract_strided_slice %73 {offsets = [0, 1], sizes = [8, 99], strides = [1, 1]} : vector<8x100xf32> to vector<8x99xf32>
    %75 = vector.extract_strided_slice %73 {offsets = [0, 0], sizes = [8, 1], strides = [1, 1]} : vector<8x100xf32> to vector<8x1xf32>
    %76 = tpu.concatenate %74, %75 in 1 : vector<8x99xf32>, vector<8x1xf32> -> vector<8x100xf32>
    %77 = arith.maximumf %73, %76 : vector<8x100xf32>
    %78 = vector.extract_strided_slice %73 {offsets = [0, 10], sizes = [8, 90], strides = [1, 1]} : vector<8x100xf32> to vector<8x90xf32>
    %79 = vector.extract_strided_slice %73 {offsets = [0, 0], sizes = [8, 10], strides = [1, 1]} : vector<8x100xf32> to vector<8x10xf32>
    %80 = tpu.concatenate %78, %79 in 1 : vector<8x90xf32>, vector<8x10xf32> -> vector<8x100xf32>
    %81 = vector.extract_strided_slice %73 {offsets = [0, 11], sizes = [8, 89], strides = [1, 1]} : vector<8x100xf32> to vector<8x89xf32>
    %82 = vector.extract_strided_slice %73 {offsets = [0, 0], sizes = [8, 11], strides = [1, 1]} : vector<8x100xf32> to vector<8x11xf32>
    %83 = tpu.concatenate %81, %82 in 1 : vector<8x89xf32>, vector<8x11xf32> -> vector<8x100xf32>
    %84 = arith.maximumf %80, %83 : vector<8x100xf32>
    %85 = arith.maximumf %77, %84 : vector<8x100xf32>
    %c0_10 = arith.constant 0 : index
    %c769 = arith.constant 769 : index
    %86 = vector.load %arg2[%c0_10, %c769] : memref<8x896xf32, #tpu.memory_space<vmem>>, vector<8x1xf32>
    %87 = vector.broadcast %86 : vector<8x1xf32> to vector<8x100xf32>
    %88 = arith.addf %85, %87 : vector<8x100xf32>
    %c0_11 = arith.constant 0 : index
    %c0_12 = arith.constant 0 : index
    %89 = vector.load %arg4[%c0_11, %c0_12] : memref<100x36xf32, #tpu.memory_space<vmem>>, vector<100x36xf32>
    %cst_13 = arith.constant dense<0.000000e+00> : vector<8x36xf32>
    %90 = tpu.matmul %88, %89, %cst_13 {dimension_numbers = #tpu.dot_dimension_numbers<[1], [0], [0], [1], [0, 0, 1, 1], [], []>} : vector<8x100xf32>, vector<100x36xf32>, vector<8x36xf32> -> vector<8x36xf32>
    %91 = math.tanh %90 : vector<8x36xf32>
    %c0_14 = arith.constant 0 : index
    %c256 = arith.constant 256 : index
    %92 = vector.load %arg2[%c0_14, %c256] : memref<8x896xf32, #tpu.memory_space<vmem>>, vector<8x72xf32>
    %93 = vector.extract_strided_slice %91 {offsets = [0, 1], sizes = [8, 35], strides = [1, 1]} : vector<8x36xf32> to vector<8x35xf32>
    %94 = vector.extract_strided_slice %91 {offsets = [0, 0], sizes = [8, 1], strides = [1, 1]} : vector<8x36xf32> to vector<8x1xf32>
    %95 = tpu.concatenate %93, %94 in 1 : vector<8x35xf32>, vector<8x1xf32> -> vector<8x36xf32>
    %96 = vector.extract_strided_slice %91 {offsets = [0, 2], sizes = [8, 34], strides = [1, 1]} : vector<8x36xf32> to vector<8x34xf32>
    %97 = vector.extract_strided_slice %91 {offsets = [0, 0], sizes = [8, 2], strides = [1, 1]} : vector<8x36xf32> to vector<8x2xf32>
    %98 = tpu.concatenate %96, %97 in 1 : vector<8x34xf32>, vector<8x2xf32> -> vector<8x36xf32>
    %99 = vector.extract_strided_slice %91 {offsets = [0, 6], sizes = [8, 30], strides = [1, 1]} : vector<8x36xf32> to vector<8x30xf32>
    %100 = vector.extract_strided_slice %91 {offsets = [0, 0], sizes = [8, 6], strides = [1, 1]} : vector<8x36xf32> to vector<8x6xf32>
    %101 = tpu.concatenate %99, %100 in 1 : vector<8x30xf32>, vector<8x6xf32> -> vector<8x36xf32>
    %102 = vector.extract_strided_slice %91 {offsets = [0, 7], sizes = [8, 29], strides = [1, 1]} : vector<8x36xf32> to vector<8x29xf32>
    %103 = vector.extract_strided_slice %91 {offsets = [0, 0], sizes = [8, 7], strides = [1, 1]} : vector<8x36xf32> to vector<8x7xf32>
    %104 = tpu.concatenate %102, %103 in 1 : vector<8x29xf32>, vector<8x7xf32> -> vector<8x36xf32>
    %105 = vector.extract_strided_slice %91 {offsets = [0, 8], sizes = [8, 28], strides = [1, 1]} : vector<8x36xf32> to vector<8x28xf32>
    %106 = vector.extract_strided_slice %91 {offsets = [0, 0], sizes = [8, 8], strides = [1, 1]} : vector<8x36xf32> to vector<8x8xf32>
    %107 = tpu.concatenate %105, %106 in 1 : vector<8x28xf32>, vector<8x8xf32> -> vector<8x36xf32>
    %108 = vector.extract_strided_slice %91 {offsets = [0, 12], sizes = [8, 24], strides = [1, 1]} : vector<8x36xf32> to vector<8x24xf32>
    %109 = vector.extract_strided_slice %91 {offsets = [0, 0], sizes = [8, 12], strides = [1, 1]} : vector<8x36xf32> to vector<8x12xf32>
    %110 = tpu.concatenate %108, %109 in 1 : vector<8x24xf32>, vector<8x12xf32> -> vector<8x36xf32>
    %111 = vector.extract_strided_slice %91 {offsets = [0, 13], sizes = [8, 23], strides = [1, 1]} : vector<8x36xf32> to vector<8x23xf32>
    %112 = vector.extract_strided_slice %91 {offsets = [0, 0], sizes = [8, 13], strides = [1, 1]} : vector<8x36xf32> to vector<8x13xf32>
    %113 = tpu.concatenate %111, %112 in 1 : vector<8x23xf32>, vector<8x13xf32> -> vector<8x36xf32>
    %114 = vector.extract_strided_slice %91 {offsets = [0, 14], sizes = [8, 22], strides = [1, 1]} : vector<8x36xf32> to vector<8x22xf32>
    %115 = vector.extract_strided_slice %91 {offsets = [0, 0], sizes = [8, 14], strides = [1, 1]} : vector<8x36xf32> to vector<8x14xf32>
    %116 = tpu.concatenate %114, %115 in 1 : vector<8x22xf32>, vector<8x14xf32> -> vector<8x36xf32>
    %117 = tpu.concatenate %91, %95, %98, %101, %104, %107, %110, %113, %116 in 0 : vector<8x36xf32>, vector<8x36xf32>, vector<8x36xf32>, vector<8x36xf32>, vector<8x36xf32>, vector<8x36xf32>, vector<8x36xf32>, vector<8x36xf32>, vector<8x36xf32> -> vector<72x36xf32>
    %cst_15 = arith.constant dense<0.000000e+00> : vector<8x36xf32>
    %118 = tpu.matmul %92, %117, %cst_15 {dimension_numbers = #tpu.dot_dimension_numbers<[1], [0], [0], [1], [0, 0, 1, 1], [], []>} : vector<8x72xf32>, vector<72x36xf32>, vector<8x36xf32> -> vector<8x36xf32>
    %119 = vector.extract_strided_slice %118 {offsets = [0, 1], sizes = [8, 35], strides = [1, 1]} : vector<8x36xf32> to vector<8x35xf32>
    %120 = vector.extract_strided_slice %118 {offsets = [0, 0], sizes = [8, 1], strides = [1, 1]} : vector<8x36xf32> to vector<8x1xf32>
    %121 = tpu.concatenate %119, %120 in 1 : vector<8x35xf32>, vector<8x1xf32> -> vector<8x36xf32>
    %122 = arith.maximumf %118, %121 : vector<8x36xf32>
    %123 = vector.extract_strided_slice %118 {offsets = [0, 6], sizes = [8, 30], strides = [1, 1]} : vector<8x36xf32> to vector<8x30xf32>
    %124 = vector.extract_strided_slice %118 {offsets = [0, 0], sizes = [8, 6], strides = [1, 1]} : vector<8x36xf32> to vector<8x6xf32>
    %125 = tpu.concatenate %123, %124 in 1 : vector<8x30xf32>, vector<8x6xf32> -> vector<8x36xf32>
    %126 = vector.extract_strided_slice %118 {offsets = [0, 7], sizes = [8, 29], strides = [1, 1]} : vector<8x36xf32> to vector<8x29xf32>
    %127 = vector.extract_strided_slice %118 {offsets = [0, 0], sizes = [8, 7], strides = [1, 1]} : vector<8x36xf32> to vector<8x7xf32>
    %128 = tpu.concatenate %126, %127 in 1 : vector<8x29xf32>, vector<8x7xf32> -> vector<8x36xf32>
    %129 = arith.maximumf %125, %128 : vector<8x36xf32>
    %130 = arith.maximumf %122, %129 : vector<8x36xf32>
    %c0_16 = arith.constant 0 : index
    %c770 = arith.constant 770 : index
    %131 = vector.load %arg2[%c0_16, %c770] : memref<8x896xf32, #tpu.memory_space<vmem>>, vector<8x1xf32>
    %132 = vector.broadcast %131 : vector<8x1xf32> to vector<8x36xf32>
    %133 = arith.addf %130, %132 : vector<8x36xf32>
    %c0_17 = arith.constant 0 : index
    %c0_18 = arith.constant 0 : index
    %134 = vector.load %arg5[%c0_17, %c0_18] : memref<36x4xf32, #tpu.memory_space<vmem>>, vector<36x4xf32>
    %cst_19 = arith.constant dense<0.000000e+00> : vector<8x4xf32>
    %135 = tpu.matmul %133, %134, %cst_19 {dimension_numbers = #tpu.dot_dimension_numbers<[1], [0], [0], [1], [0, 0, 1, 1], [], []>} : vector<8x36xf32>, vector<36x4xf32>, vector<8x4xf32> -> vector<8x4xf32>
    %136 = math.tanh %135 : vector<8x4xf32>
    %c0_20 = arith.constant 0 : index
    %c0_21 = arith.constant 0 : index
    %c0_22 = arith.constant 0 : index
    %137 = vector.load %arg9[%c0_20, %c0_21, %c0_22] : memref<1x8x4xf32, #tpu.memory_space<vmem>>, vector<1x8x4xf32>
    %138 = vector.shape_cast %137 : vector<1x8x4xf32> to vector<8x4xf32>
    %139 = vector.shape_cast %136 : vector<8x4xf32> to vector<1x8x4xf32>
    tpu.vector_store %arg9[%c0_20, %c0_21, %c0_22], %139 {strides = array<i32>} : memref<1x8x4xf32, #tpu.memory_space<vmem>>, vector<1x8x4xf32>,
    %c0_23 = arith.constant 0 : index
    %c0_24 = arith.constant 0 : index
    %140 = vector.load %arg6[%c0_23, %c0_24] : memref<4x49xf32, #tpu.memory_space<vmem>>, vector<4x49xf32>
    %cst_25 = arith.constant dense<0.000000e+00> : vector<8x49xf32>
    %141 = tpu.matmul %136, %140, %cst_25 {dimension_numbers = #tpu.dot_dimension_numbers<[1], [0], [0], [1], [0, 0, 1, 1], [], []>} : vector<8x4xf32>, vector<4x49xf32>, vector<8x49xf32> -> vector<8x49xf32>
    %c0_26 = arith.constant 0 : index
    %c384 = arith.constant 384 : index
    %142 = vector.load %arg2[%c0_26, %c384] : memref<8x896xf32, #tpu.memory_space<vmem>>, vector<8x128xf32>
    %143 = vector.extract_strided_slice %141 {offsets = [0, 1], sizes = [8, 48], strides = [1, 1]} : vector<8x49xf32> to vector<8x48xf32>
    %144 = vector.extract_strided_slice %141 {offsets = [0, 0], sizes = [8, 1], strides = [1, 1]} : vector<8x49xf32> to vector<8x1xf32>
    %145 = tpu.concatenate %143, %144 in 1 : vector<8x48xf32>, vector<8x1xf32> -> vector<8x49xf32>
    %146 = vector.extract_strided_slice %141 {offsets = [0, 2], sizes = [8, 47], strides = [1, 1]} : vector<8x49xf32> to vector<8x47xf32>
    %147 = vector.extract_strided_slice %141 {offsets = [0, 0], sizes = [8, 2], strides = [1, 1]} : vector<8x49xf32> to vector<8x2xf32>
    %148 = tpu.concatenate %146, %147 in 1 : vector<8x47xf32>, vector<8x2xf32> -> vector<8x49xf32>
    %149 = vector.extract_strided_slice %141 {offsets = [0, 3], sizes = [8, 46], strides = [1, 1]} : vector<8x49xf32> to vector<8x46xf32>
    %150 = vector.extract_strided_slice %141 {offsets = [0, 0], sizes = [8, 3], strides = [1, 1]} : vector<8x49xf32> to vector<8x3xf32>
    %151 = tpu.concatenate %149, %150 in 1 : vector<8x46xf32>, vector<8x3xf32> -> vector<8x49xf32>
    %152 = vector.extract_strided_slice %141 {offsets = [0, 7], sizes = [8, 42], strides = [1, 1]} : vector<8x49xf32> to vector<8x42xf32>
    %153 = vector.extract_strided_slice %141 {offsets = [0, 0], sizes = [8, 7], strides = [1, 1]} : vector<8x49xf32> to vector<8x7xf32>
    %154 = tpu.concatenate %152, %153 in 1 : vector<8x42xf32>, vector<8x7xf32> -> vector<8x49xf32>
    %155 = vector.extract_strided_slice %141 {offsets = [0, 8], sizes = [8, 41], strides = [1, 1]} : vector<8x49xf32> to vector<8x41xf32>
    %156 = vector.extract_strided_slice %141 {offsets = [0, 0], sizes = [8, 8], strides = [1, 1]} : vector<8x49xf32> to vector<8x8xf32>
    %157 = tpu.concatenate %155, %156 in 1 : vector<8x41xf32>, vector<8x8xf32> -> vector<8x49xf32>
    %158 = vector.extract_strided_slice %141 {offsets = [0, 9], sizes = [8, 40], strides = [1, 1]} : vector<8x49xf32> to vector<8x40xf32>
    %159 = vector.extract_strided_slice %141 {offsets = [0, 0], sizes = [8, 9], strides = [1, 1]} : vector<8x49xf32> to vector<8x9xf32>
    %160 = tpu.concatenate %158, %159 in 1 : vector<8x40xf32>, vector<8x9xf32> -> vector<8x49xf32>
    %161 = vector.extract_strided_slice %141 {offsets = [0, 10], sizes = [8, 39], strides = [1, 1]} : vector<8x49xf32> to vector<8x39xf32>
    %162 = vector.extract_strided_slice %141 {offsets = [0, 0], sizes = [8, 10], strides = [1, 1]} : vector<8x49xf32> to vector<8x10xf32>
    %163 = tpu.concatenate %161, %162 in 1 : vector<8x39xf32>, vector<8x10xf32> -> vector<8x49xf32>
    %164 = vector.extract_strided_slice %141 {offsets = [0, 14], sizes = [8, 35], strides = [1, 1]} : vector<8x49xf32> to vector<8x35xf32>
    %165 = vector.extract_strided_slice %141 {offsets = [0, 0], sizes = [8, 14], strides = [1, 1]} : vector<8x49xf32> to vector<8x14xf32>
    %166 = tpu.concatenate %164, %165 in 1 : vector<8x35xf32>, vector<8x14xf32> -> vector<8x49xf32>
    %167 = vector.extract_strided_slice %141 {offsets = [0, 15], sizes = [8, 34], strides = [1, 1]} : vector<8x49xf32> to vector<8x34xf32>
    %168 = vector.extract_strided_slice %141 {offsets = [0, 0], sizes = [8, 15], strides = [1, 1]} : vector<8x49xf32> to vector<8x15xf32>
    %169 = tpu.concatenate %167, %168 in 1 : vector<8x34xf32>, vector<8x15xf32> -> vector<8x49xf32>
    %170 = vector.extract_strided_slice %141 {offsets = [0, 16], sizes = [8, 33], strides = [1, 1]} : vector<8x49xf32> to vector<8x33xf32>
    %171 = vector.extract_strided_slice %141 {offsets = [0, 0], sizes = [8, 16], strides = [1, 1]} : vector<8x49xf32> to vector<8x16xf32>
    %172 = tpu.concatenate %170, %171 in 1 : vector<8x33xf32>, vector<8x16xf32> -> vector<8x49xf32>
    %173 = vector.extract_strided_slice %141 {offsets = [0, 17], sizes = [8, 32], strides = [1, 1]} : vector<8x49xf32> to vector<8x32xf32>
    %174 = vector.extract_strided_slice %141 {offsets = [0, 0], sizes = [8, 17], strides = [1, 1]} : vector<8x49xf32> to vector<8x17xf32>
    %175 = tpu.concatenate %173, %174 in 1 : vector<8x32xf32>, vector<8x17xf32> -> vector<8x49xf32>
    %176 = vector.extract_strided_slice %141 {offsets = [0, 21], sizes = [8, 28], strides = [1, 1]} : vector<8x49xf32> to vector<8x28xf32>
    %177 = vector.extract_strided_slice %141 {offsets = [0, 0], sizes = [8, 21], strides = [1, 1]} : vector<8x49xf32> to vector<8x21xf32>
    %178 = tpu.concatenate %176, %177 in 1 : vector<8x28xf32>, vector<8x21xf32> -> vector<8x49xf32>
    %179 = vector.extract_strided_slice %141 {offsets = [0, 22], sizes = [8, 27], strides = [1, 1]} : vector<8x49xf32> to vector<8x27xf32>
    %180 = vector.extract_strided_slice %141 {offsets = [0, 0], sizes = [8, 22], strides = [1, 1]} : vector<8x49xf32> to vector<8x22xf32>
    %181 = tpu.concatenate %179, %180 in 1 : vector<8x27xf32>, vector<8x22xf32> -> vector<8x49xf32>
    %182 = vector.extract_strided_slice %141 {offsets = [0, 23], sizes = [8, 26], strides = [1, 1]} : vector<8x49xf32> to vector<8x26xf32>
    %183 = vector.extract_strided_slice %141 {offsets = [0, 0], sizes = [8, 23], strides = [1, 1]} : vector<8x49xf32> to vector<8x23xf32>
    %184 = tpu.concatenate %182, %183 in 1 : vector<8x26xf32>, vector<8x23xf32> -> vector<8x49xf32>
    %185 = vector.extract_strided_slice %141 {offsets = [0, 24], sizes = [8, 25], strides = [1, 1]} : vector<8x49xf32> to vector<8x25xf32>
    %186 = vector.extract_strided_slice %141 {offsets = [0, 0], sizes = [8, 24], strides = [1, 1]} : vector<8x49xf32> to vector<8x24xf32>
    %187 = tpu.concatenate %185, %186 in 1 : vector<8x25xf32>, vector<8x24xf32> -> vector<8x49xf32>
    %188 = tpu.concatenate %141, %145, %148, %151, %154, %157, %160, %163, %166, %169, %172, %175, %178, %181, %184, %187 in 0 : vector<8x49xf32>, vector<8x49xf32>, vector<8x49xf32>, vector<8x49xf32>, vector<8x49xf32>, vector<8x49xf32>, vector<8x49xf32>, vector<8x49xf32>, vector<8x49xf32>, vector<8x49xf32>, vector<8x49xf32>, vector<8x49xf32>, vector<8x49xf32>, vector<8x49xf32>, vector<8x49xf32>, vector<8x49xf32> -> vector<128x49xf32>
    %cst_27 = arith.constant dense<0.000000e+00> : vector<8x49xf32>
    %189 = tpu.matmul %142, %188, %cst_27 {dimension_numbers = #tpu.dot_dimension_numbers<[1], [0], [0], [1], [0, 0, 1, 1], [], []>} : vector<8x128xf32>, vector<128x49xf32>, vector<8x49xf32> -> vector<8x49xf32>
    %c0_28 = arith.constant 0 : index
    %c771 = arith.constant 771 : index
    %190 = vector.load %arg2[%c0_28, %c771] : memref<8x896xf32, #tpu.memory_space<vmem>>, vector<8x1xf32>
    %191 = vector.broadcast %190 : vector<8x1xf32> to vector<8x49xf32>
    %192 = arith.addf %189, %191 : vector<8x49xf32>
    %193 = math.tanh %192 : vector<8x49xf32>
    %c0_29 = arith.constant 0 : index
    %c0_30 = arith.constant 0 : index
    %194 = vector.load %arg7[%c0_29, %c0_30] : memref<49x121xf32, #tpu.memory_space<vmem>>, vector<49x121xf32>
    %cst_31 = arith.constant dense<0.000000e+00> : vector<8x121xf32>
    %195 = tpu.matmul %193, %194, %cst_31 {dimension_numbers = #tpu.dot_dimension_numbers<[1], [0], [0], [1], [0, 0, 1, 1], [], []>} : vector<8x49xf32>, vector<49x121xf32>, vector<8x121xf32> -> vector<8x121xf32>
    %c0_32 = arith.constant 0 : index
    %c512 = arith.constant 512 : index
    %196 = vector.load %arg2[%c0_32, %c512] : memref<8x896xf32, #tpu.memory_space<vmem>>, vector<8x128xf32>
    %197 = vector.extract_strided_slice %195 {offsets = [0, 1], sizes = [8, 120], strides = [1, 1]} : vector<8x121xf32> to vector<8x120xf32>
    %198 = vector.extract_strided_slice %195 {offsets = [0, 0], sizes = [8, 1], strides = [1, 1]} : vector<8x121xf32> to vector<8x1xf32>
    %199 = tpu.concatenate %197, %198 in 1 : vector<8x120xf32>, vector<8x1xf32> -> vector<8x121xf32>
    %200 = vector.extract_strided_slice %195 {offsets = [0, 2], sizes = [8, 119], strides = [1, 1]} : vector<8x121xf32> to vector<8x119xf32>
    %201 = vector.extract_strided_slice %195 {offsets = [0, 0], sizes = [8, 2], strides = [1, 1]} : vector<8x121xf32> to vector<8x2xf32>
    %202 = tpu.concatenate %200, %201 in 1 : vector<8x119xf32>, vector<8x2xf32> -> vector<8x121xf32>
    %203 = vector.extract_strided_slice %195 {offsets = [0, 3], sizes = [8, 118], strides = [1, 1]} : vector<8x121xf32> to vector<8x118xf32>
    %204 = vector.extract_strided_slice %195 {offsets = [0, 0], sizes = [8, 3], strides = [1, 1]} : vector<8x121xf32> to vector<8x3xf32>
    %205 = tpu.concatenate %203, %204 in 1 : vector<8x118xf32>, vector<8x3xf32> -> vector<8x121xf32>
    %206 = vector.extract_strided_slice %195 {offsets = [0, 11], sizes = [8, 110], strides = [1, 1]} : vector<8x121xf32> to vector<8x110xf32>
    %207 = vector.extract_strided_slice %195 {offsets = [0, 0], sizes = [8, 11], strides = [1, 1]} : vector<8x121xf32> to vector<8x11xf32>
    %208 = tpu.concatenate %206, %207 in 1 : vector<8x110xf32>, vector<8x11xf32> -> vector<8x121xf32>
    %209 = vector.extract_strided_slice %195 {offsets = [0, 12], sizes = [8, 109], strides = [1, 1]} : vector<8x121xf32> to vector<8x109xf32>
    %210 = vector.extract_strided_slice %195 {offsets = [0, 0], sizes = [8, 12], strides = [1, 1]} : vector<8x121xf32> to vector<8x12xf32>
    %211 = tpu.concatenate %209, %210 in 1 : vector<8x109xf32>, vector<8x12xf32> -> vector<8x121xf32>
    %212 = vector.extract_strided_slice %195 {offsets = [0, 13], sizes = [8, 108], strides = [1, 1]} : vector<8x121xf32> to vector<8x108xf32>
    %213 = vector.extract_strided_slice %195 {offsets = [0, 0], sizes = [8, 13], strides = [1, 1]} : vector<8x121xf32> to vector<8x13xf32>
    %214 = tpu.concatenate %212, %213 in 1 : vector<8x108xf32>, vector<8x13xf32> -> vector<8x121xf32>
    %215 = vector.extract_strided_slice %195 {offsets = [0, 14], sizes = [8, 107], strides = [1, 1]} : vector<8x121xf32> to vector<8x107xf32>
    %216 = vector.extract_strided_slice %195 {offsets = [0, 0], sizes = [8, 14], strides = [1, 1]} : vector<8x121xf32> to vector<8x14xf32>
    %217 = tpu.concatenate %215, %216 in 1 : vector<8x107xf32>, vector<8x14xf32> -> vector<8x121xf32>
    %218 = vector.extract_strided_slice %195 {offsets = [0, 22], sizes = [8, 99], strides = [1, 1]} : vector<8x121xf32> to vector<8x99xf32>
    %219 = vector.extract_strided_slice %195 {offsets = [0, 0], sizes = [8, 22], strides = [1, 1]} : vector<8x121xf32> to vector<8x22xf32>
    %220 = tpu.concatenate %218, %219 in 1 : vector<8x99xf32>, vector<8x22xf32> -> vector<8x121xf32>
    %221 = vector.extract_strided_slice %195 {offsets = [0, 23], sizes = [8, 98], strides = [1, 1]} : vector<8x121xf32> to vector<8x98xf32>
    %222 = vector.extract_strided_slice %195 {offsets = [0, 0], sizes = [8, 23], strides = [1, 1]} : vector<8x121xf32> to vector<8x23xf32>
    %223 = tpu.concatenate %221, %222 in 1 : vector<8x98xf32>, vector<8x23xf32> -> vector<8x121xf32>
    %224 = vector.extract_strided_slice %195 {offsets = [0, 24], sizes = [8, 97], strides = [1, 1]} : vector<8x121xf32> to vector<8x97xf32>
    %225 = vector.extract_strided_slice %195 {offsets = [0, 0], sizes = [8, 24], strides = [1, 1]} : vector<8x121xf32> to vector<8x24xf32>
    %226 = tpu.concatenate %224, %225 in 1 : vector<8x97xf32>, vector<8x24xf32> -> vector<8x121xf32>
    %227 = vector.extract_strided_slice %195 {offsets = [0, 25], sizes = [8, 96], strides = [1, 1]} : vector<8x121xf32> to vector<8x96xf32>
    %228 = vector.extract_strided_slice %195 {offsets = [0, 0], sizes = [8, 25], strides = [1, 1]} : vector<8x121xf32> to vector<8x25xf32>
    %229 = tpu.concatenate %227, %228 in 1 : vector<8x96xf32>, vector<8x25xf32> -> vector<8x121xf32>
    %230 = vector.extract_strided_slice %195 {offsets = [0, 33], sizes = [8, 88], strides = [1, 1]} : vector<8x121xf32> to vector<8x88xf32>
    %231 = vector.extract_strided_slice %195 {offsets = [0, 0], sizes = [8, 33], strides = [1, 1]} : vector<8x121xf32> to vector<8x33xf32>
    %232 = tpu.concatenate %230, %231 in 1 : vector<8x88xf32>, vector<8x33xf32> -> vector<8x121xf32>
    %233 = vector.extract_strided_slice %195 {offsets = [0, 34], sizes = [8, 87], strides = [1, 1]} : vector<8x121xf32> to vector<8x87xf32>
    %234 = vector.extract_strided_slice %195 {offsets = [0, 0], sizes = [8, 34], strides = [1, 1]} : vector<8x121xf32> to vector<8x34xf32>
    %235 = tpu.concatenate %233, %234 in 1 : vector<8x87xf32>, vector<8x34xf32> -> vector<8x121xf32>
    %236 = vector.extract_strided_slice %195 {offsets = [0, 35], sizes = [8, 86], strides = [1, 1]} : vector<8x121xf32> to vector<8x86xf32>
    %237 = vector.extract_strided_slice %195 {offsets = [0, 0], sizes = [8, 35], strides = [1, 1]} : vector<8x121xf32> to vector<8x35xf32>
    %238 = tpu.concatenate %236, %237 in 1 : vector<8x86xf32>, vector<8x35xf32> -> vector<8x121xf32>
    %239 = vector.extract_strided_slice %195 {offsets = [0, 36], sizes = [8, 85], strides = [1, 1]} : vector<8x121xf32> to vector<8x85xf32>
    %240 = vector.extract_strided_slice %195 {offsets = [0, 0], sizes = [8, 36], strides = [1, 1]} : vector<8x121xf32> to vector<8x36xf32>
    %241 = tpu.concatenate %239, %240 in 1 : vector<8x85xf32>, vector<8x36xf32> -> vector<8x121xf32>
    %242 = tpu.concatenate %195, %199, %202, %205, %208, %211, %214, %217, %220, %223, %226, %229, %232, %235, %238, %241 in 0 : vector<8x121xf32>, vector<8x121xf32>, vector<8x121xf32>, vector<8x121xf32>, vector<8x121xf32>, vector<8x121xf32>, vector<8x121xf32>, vector<8x121xf32>, vector<8x121xf32>, vector<8x121xf32>, vector<8x121xf32>, vector<8x121xf32>, vector<8x121xf32>, vector<8x121xf32>, vector<8x121xf32>, vector<8x121xf32> -> vector<128x121xf32>
    %cst_33 = arith.constant dense<0.000000e+00> : vector<8x121xf32>
    %243 = tpu.matmul %196, %242, %cst_33 {dimension_numbers = #tpu.dot_dimension_numbers<[1], [0], [0], [1], [0, 0, 1, 1], [], []>} : vector<8x128xf32>, vector<128x121xf32>, vector<8x121xf32> -> vector<8x121xf32>
    %c0_34 = arith.constant 0 : index
    %c772 = arith.constant 772 : index
    %244 = vector.load %arg2[%c0_34, %c772] : memref<8x896xf32, #tpu.memory_space<vmem>>, vector<8x1xf32>
    %245 = vector.broadcast %244 : vector<8x1xf32> to vector<8x121xf32>
    %246 = arith.addf %243, %245 : vector<8x121xf32>
    %247 = math.tanh %246 : vector<8x121xf32>
    %c0_35 = arith.constant 0 : index
    %c0_36 = arith.constant 0 : index
    %248 = vector.load %arg8[%c0_35, %c0_36] : memref<121x361xf32, #tpu.memory_space<vmem>>, vector<121x361xf32>
    %cst_37 = arith.constant dense<0.000000e+00> : vector<8x361xf32>
    %249 = tpu.matmul %247, %248, %cst_37 {dimension_numbers = #tpu.dot_dimension_numbers<[1], [0], [0], [1], [0, 0, 1, 1], [], []>} : vector<8x121xf32>, vector<121x361xf32>, vector<8x361xf32> -> vector<8x361xf32>
    %c0_38 = arith.constant 0 : index
    %c640 = arith.constant 640 : index
    %250 = vector.load %arg2[%c0_38, %c640] : memref<8x896xf32, #tpu.memory_space<vmem>>, vector<1x72xf32>
    %251 = vector.extract_strided_slice %249 {offsets = [0, 1], sizes = [8, 360], strides = [1, 1]} : vector<8x361xf32> to vector<8x360xf32>
    %252 = vector.extract_strided_slice %249 {offsets = [0, 0], sizes = [8, 1], strides = [1, 1]} : vector<8x361xf32> to vector<8x1xf32>
    %253 = tpu.concatenate %251, %252 in 1 : vector<8x360xf32>, vector<8x1xf32> -> vector<8x361xf32>
    %254 = vector.extract_strided_slice %249 {offsets = [0, 2], sizes = [8, 359], strides = [1, 1]} : vector<8x361xf32> to vector<8x359xf32>
    %255 = vector.extract_strided_slice %249 {offsets = [0, 0], sizes = [8, 2], strides = [1, 1]} : vector<8x361xf32> to vector<8x2xf32>
    %256 = tpu.concatenate %254, %255 in 1 : vector<8x359xf32>, vector<8x2xf32> -> vector<8x361xf32>
    %257 = vector.extract_strided_slice %249 {offsets = [0, 19], sizes = [8, 342], strides = [1, 1]} : vector<8x361xf32> to vector<8x342xf32>
    %258 = vector.extract_strided_slice %249 {offsets = [0, 0], sizes = [8, 19], strides = [1, 1]} : vector<8x361xf32> to vector<8x19xf32>
    %259 = tpu.concatenate %257, %258 in 1 : vector<8x342xf32>, vector<8x19xf32> -> vector<8x361xf32>
    %260 = vector.extract_strided_slice %249 {offsets = [0, 20], sizes = [8, 341], strides = [1, 1]} : vector<8x361xf32> to vector<8x341xf32>
    %261 = vector.extract_strided_slice %249 {offsets = [0, 0], sizes = [8, 20], strides = [1, 1]} : vector<8x361xf32> to vector<8x20xf32>
    %262 = tpu.concatenate %260, %261 in 1 : vector<8x341xf32>, vector<8x20xf32> -> vector<8x361xf32>
    %263 = vector.extract_strided_slice %249 {offsets = [0, 21], sizes = [8, 340], strides = [1, 1]} : vector<8x361xf32> to vector<8x340xf32>
    %264 = vector.extract_strided_slice %249 {offsets = [0, 0], sizes = [8, 21], strides = [1, 1]} : vector<8x361xf32> to vector<8x21xf32>
    %265 = tpu.concatenate %263, %264 in 1 : vector<8x340xf32>, vector<8x21xf32> -> vector<8x361xf32>
    %266 = vector.extract_strided_slice %249 {offsets = [0, 38], sizes = [8, 323], strides = [1, 1]} : vector<8x361xf32> to vector<8x323xf32>
    %267 = vector.extract_strided_slice %249 {offsets = [0, 0], sizes = [8, 38], strides = [1, 1]} : vector<8x361xf32> to vector<8x38xf32>
    %268 = tpu.concatenate %266, %267 in 1 : vector<8x323xf32>, vector<8x38xf32> -> vector<8x361xf32>
    %269 = vector.extract_strided_slice %249 {offsets = [0, 39], sizes = [8, 322], strides = [1, 1]} : vector<8x361xf32> to vector<8x322xf32>
    %270 = vector.extract_strided_slice %249 {offsets = [0, 0], sizes = [8, 39], strides = [1, 1]} : vector<8x361xf32> to vector<8x39xf32>
    %271 = tpu.concatenate %269, %270 in 1 : vector<8x322xf32>, vector<8x39xf32> -> vector<8x361xf32>
    %272 = vector.extract_strided_slice %249 {offsets = [0, 40], sizes = [8, 321], strides = [1, 1]} : vector<8x361xf32> to vector<8x321xf32>
    %273 = vector.extract_strided_slice %249 {offsets = [0, 0], sizes = [8, 40], strides = [1, 1]} : vector<8x361xf32> to vector<8x40xf32>
    %274 = tpu.concatenate %272, %273 in 1 : vector<8x321xf32>, vector<8x40xf32> -> vector<8x361xf32>
    %275 = tpu.concatenate %249, %253, %256, %259, %262, %265, %268, %271, %274 in 0 : vector<8x361xf32>, vector<8x361xf32>, vector<8x361xf32>, vector<8x361xf32>, vector<8x361xf32>, vector<8x361xf32>, vector<8x361xf32>, vector<8x361xf32>, vector<8x361xf32> -> vector<72x361xf32>
    %cst_39 = arith.constant dense<0.000000e+00> : vector<1x361xf32>
    %276 = tpu.matmul %250, %275, %cst_39 {dimension_numbers = #tpu.dot_dimension_numbers<[1], [0], [0], [1], [0, 0, 1, 1], [], []>} : vector<1x72xf32>, vector<72x361xf32>, vector<1x361xf32> -> vector<1x361xf32>
    %c0_40 = arith.constant 0 : index
    %c773 = arith.constant 773 : index
    %277 = vector.load %arg2[%c0_40, %c773] : memref<8x896xf32, #tpu.memory_space<vmem>>, vector<1x1xf32>
    %278 = vector.broadcast %277 : vector<1x1xf32> to vector<1x361xf32>
    %279 = arith.addf %276, %278 : vector<1x361xf32>
    %c0_41 = arith.constant 0 : index
    %c0_42 = arith.constant 0 : index
    %c0_43 = arith.constant 0 : index
    %280 = vector.load %arg10[%c0_41, %c0_42, %c0_43] : memref<1x1x361xf32, #tpu.memory_space<vmem>>, vector<1x1x361xf32>
    %281 = vector.shape_cast %280 : vector<1x1x361xf32> to vector<1x361xf32>
    %282 = vector.shape_cast %279 : vector<1x361xf32> to vector<1x1x361xf32>
    tpu.vector_store %arg10[%c0_41, %c0_42, %c0_43], %282 {strides = array<i32>} : memref<1x1x361xf32, #tpu.memory_space<vmem>>, vector<1x1x361xf32>,
    return
  }
  func.func @transform_0(%arg0: i32) -> (i32, i32, i32) {
    %c0_i32 = arith.constant 0 : i32
    %c0_i32_0 = arith.constant 0 : i32
    %c0_i32_1 = arith.constant 0 : i32
    return %arg0, %c0_i32, %c0_i32_0 : i32, i32, i32
  }
  func.func @transform_1(%arg0: i32) -> (i32, i32) {
    %c0_i32 = arith.constant 0 : i32
    %c0_i32_0 = arith.constant 0 : i32
    %c0_i32_1 = arith.constant 0 : i32
    return %c0_i32, %c0_i32_0 : i32, i32
  }
  func.func @transform_2(%arg0: i32) -> (i32, i32) {
    %c0_i32 = arith.constant 0 : i32
    %c0_i32_0 = arith.constant 0 : i32
    %c0_i32_1 = arith.constant 0 : i32
    return %c0_i32, %c0_i32_0 : i32, i32
  }
  func.func @transform_3(%arg0: i32) -> (i32, i32) {
    %c0_i32 = arith.constant 0 : i32
    %c0_i32_0 = arith.constant 0 : i32
    %c0_i32_1 = arith.constant 0 : i32
    return %c0_i32, %c0_i32_0 : i32, i32
  }
  func.func @transform_4(%arg0: i32) -> (i32, i32) {
    %c0_i32 = arith.constant 0 : i32
    %c0_i32_0 = arith.constant 0 : i32
    %c0_i32_1 = arith.constant 0 : i32
    return %c0_i32, %c0_i32_0 : i32, i32
  }
  func.func @transform_5(%arg0: i32) -> (i32, i32) {
    %c0_i32 = arith.constant 0 : i32
    %c0_i32_0 = arith.constant 0 : i32
    %c0_i32_1 = arith.constant 0 : i32
    return %c0_i32, %c0_i32_0 : i32, i32
  }
  func.func @transform_6(%arg0: i32) -> (i32, i32) {
    %c0_i32 = arith.constant 0 : i32
    %c0_i32_0 = arith.constant 0 : i32
    %c0_i32_1 = arith.constant 0 : i32
    return %c0_i32, %c0_i32_0 : i32, i32
  }
  func.func @transform_7(%arg0: i32) -> (i32, i32) {
    %c0_i32 = arith.constant 0 : i32
    %c0_i32_0 = arith.constant 0 : i32
    %c0_i32_1 = arith.constant 0 : i32
    return %c0_i32, %c0_i32_0 : i32, i32
  }
  func.func @transform_8(%arg0: i32) -> (i32, i32, i32) {
    %c0_i32 = arith.constant 0 : i32
    %c0_i32_0 = arith.constant 0 : i32
    %c0_i32_1 = arith.constant 0 : i32
    return %arg0, %c0_i32, %c0_i32_0 : i32, i32, i32
  }
  func.func @transform_9(%arg0: i32) -> (i32, i32, i32) {
    %c0_i32 = arith.constant 0 : i32
    %c0_i32_0 = arith.constant 0 : i32
    %c0_i32_1 = arith.constant 0 : i32
    return %arg0, %c0_i32, %c0_i32_0 : i32, i32, i32
  }
}

</mosaic_0001>

<llo_original>
// kernel: cnn_forward.1
$region0: #{cnn_forward.1}
  #allocation0 [shape = 'u32[]', space=smem, size = 0x4, offset = 0x4, fixed_abs, tag = 'smem constant byte address 0x4 - core index']
  #allocation1 [shape = 'u32[72,128]{1,0:T(1,128)}', space=vmem, size = 0x9000, scoped, tag = 'internal scratch']
  %s0 = inlined_call_operand.vmem [shape: f32[2,8,324], index: 0, kind: input, shape index: {}]
  %s1 = inlined_call_operand.vmem [shape: f32[8,896], index: 1, kind: input, shape index: {}]
  %s2 = inlined_call_operand.vmem [shape: f32[324,100], index: 2, kind: input, shape index: {}]
  %s3 = inlined_call_operand.vmem [shape: f32[100,36], index: 3, kind: input, shape index: {}]
  %s4 = inlined_call_operand.vmem [shape: f32[36,4], index: 4, kind: input, shape index: {}]
  %s5 = inlined_call_operand.vmem [shape: f32[4,49], index: 5, kind: input, shape index: {}]
  %s6 = inlined_call_operand.vmem [shape: f32[49,121], index: 6, kind: input, shape index: {}]
  %s7 = inlined_call_operand.vmem [shape: f32[121,361], index: 7, kind: input, shape index: {}]
  %s8 = inlined_call_operand.vmem [shape: f32[2,8,4], index: 8, kind: output, shape index: {0}]
  %s9 = inlined_call_operand.vmem [shape: f32[2,1,361], index: 9, kind: output, shape index: {1}]
  %10 = xla_tuple %s8, %s9
  %s11 = sld [smem:[#allocation0]]
  $region73: #{cnn_forward.1} parent=0
    _
  %s13 = ssub.s32 1, %s11
  %s14 = scalar_select 0, %s13, %s11
  loop: start=0, step=1, limit=4
  $region2: #{cnn_forward.1} parent=0 // loop_pre_header
    _
  $region3: #{cnn_forward.1} parent=0 // loop_header
    %s16 = sphi 0, %s20
    %p17 = scmp.ge.s32.totalorder %s16, 4
    %s26 = sphi 0, %s28
    %s29 = sphi 0, %s26
    %s30 = sphi 0, %s29
    %s46 = sphi 0, %s30
    %s50 = sphi 0, %s50
    %s52 = sphi 0, %s50
    %s53 = sphi 0, %s52
    %s67 = sphi 0, %s53
    %s71 = sphi 0, %s71
    %s73 = sphi 0, %s71
    %s74 = sphi 0, %s73
    %s88 = sphi 0, %s74
    %s92 = sphi 0, %s92
    %s94 = sphi 0, %s92
    %s95 = sphi 0, %s94
    %s109 = sphi 0, %s95
    %s113 = sphi 0, %s113
    %s115 = sphi 0, %s113
    %s116 = sphi 0, %s115
    %s130 = sphi 0, %s116
    %s134 = sphi 0, %s134
    %s136 = sphi 0, %s134
    %s137 = sphi 0, %s136
    %s151 = sphi 0, %s137
    %s155 = sphi 0, %s155
    %s157 = sphi 0, %s155
    %s158 = sphi 0, %s157
    %s172 = sphi 0, %s158
    %s176 = sphi 0, %s176
    %s178 = sphi 0, %s176
    %s179 = sphi 0, %s178
    %s193 = sphi 0, %s179
    %s199 = sphi 0, %s201
    %s202 = sphi 0, %s199
    %s203 = sphi 0, %s202
    %s219 = sphi 0, %s203
    %s225 = sphi 0, %s227
    %s228 = sphi 0, %s225
    %s229 = sphi 0, %s228
    %s245 = sphi 0, %s229
  $region4: #{cnn_forward.1} parent=0 // loop_header_branch
    %19 = sbr.rel (%p17) target = $region8
  $region5: #{cnn_forward.1} parent=0 // loop_body
    %s21 = ssub.s32 %s16, 1
    %s22 = ssub.s32 %s16, 2
    %s23 = sadd.s32 %s16, 1
    %s24 = ssub.s32 %s16, %s23
    %p25 = scmp.eq.s32.totalorder %s24, 0
    %s27 = sadd.s32 %s26, 1
    %s28 = scalar_select %p25, %s26, %s27
    %p31 = pneg %p25
    %p32 = scmp.eq.s32.totalorder %s16, 1
    %p33 = por %p31, %p32
    %p34 = scmp.ne.s32.totalorder %s26, %s29
    %p35 = scmp.eq.s32.totalorder %s16, 0
    %p36 = por %p34, %p35
    %p37 = scmp.ne.s32.totalorder %s26, %s29
    %p38 = scmp.eq.s32.totalorder %s21, 1
    %p39 = por %p37, %p38
    %p40 = scmp.ne.s32.totalorder %s29, %s30
    %p41 = scmp.eq.s32.totalorder %s21, 0
    %p42 = por %p40, %p41
    %p43 = scmp.ne.s32.totalorder %s29, %s30
    %p44 = scmp.eq.s32.totalorder %s22, 1
    %p45 = por %p43, %p44
    %p47 = scmp.ne.s32.totalorder %s30, %s46
    %p48 = scmp.eq.s32.totalorder %s22, 0
    %p49 = por %p47, %p48
    %s51 = sadd.s32 %s50, 1
    %p54 = scmp.eq.s32.totalorder %s16, 1
    %p55 = scmp.ne.s32.totalorder %s50, %s52
    %p56 = scmp.eq.s32.totalorder %s16, 0
    %p57 = por %p55, %p56
    %p58 = scmp.ne.s32.totalorder %s50, %s52
    %p59 = scmp.eq.s32.totalorder %s21, 1
    %p60 = por %p58, %p59
    %p61 = scmp.ne.s32.totalorder %s52, %s53
    %p62 = scmp.eq.s32.totalorder %s21, 0
    %p63 = por %p61, %p62
    %p64 = scmp.ne.s32.totalorder %s52, %s53
    %p65 = scmp.eq.s32.totalorder %s22, 1
    %p66 = por %p64, %p65
    %p68 = scmp.ne.s32.totalorder %s53, %s67
    %p69 = scmp.eq.s32.totalorder %s22, 0
    %p70 = por %p68, %p69
    %s72 = sadd.s32 %s71, 1
    %p75 = scmp.eq.s32.totalorder %s16, 1
    %p76 = scmp.ne.s32.totalorder %s71, %s73
    %p77 = scmp.eq.s32.totalorder %s16, 0
    %p78 = por %p76, %p77
    %p79 = scmp.ne.s32.totalorder %s71, %s73
    %p80 = scmp.eq.s32.totalorder %s21, 1
    %p81 = por %p79, %p80
    %p82 = scmp.ne.s32.totalorder %s73, %s74
    %p83 = scmp.eq.s32.totalorder %s21, 0
    %p84 = por %p82, %p83
    %p85 = scmp.ne.s32.totalorder %s73, %s74
    %p86 = scmp.eq.s32.totalorder %s22, 1
    %p87 = por %p85, %p86
    %p89 = scmp.ne.s32.totalorder %s74, %s88
    %p90 = scmp.eq.s32.totalorder %s22, 0
    %p91 = por %p89, %p90
    %s93 = sadd.s32 %s92, 1
    %p96 = scmp.eq.s32.totalorder %s16, 1
    %p97 = scmp.ne.s32.totalorder %s92, %s94
    %p98 = scmp.eq.s32.totalorder %s16, 0
    %p99 = por %p97, %p98
    %p100 = scmp.ne.s32.totalorder %s92, %s94
    %p101 = scmp.eq.s32.totalorder %s21, 1
    %p102 = por %p100, %p101
    %p103 = scmp.ne.s32.totalorder %s94, %s95
    %p104 = scmp.eq.s32.totalorder %s21, 0
    %p105 = por %p103, %p104
    %p106 = scmp.ne.s32.totalorder %s94, %s95
    %p107 = scmp.eq.s32.totalorder %s22, 1
    %p108 = por %p106, %p107
    %p110 = scmp.ne.s32.totalorder %s95, %s109
    %p111 = scmp.eq.s32.totalorder %s22, 0
    %p112 = por %p110, %p111
    %s114 = sadd.s32 %s113, 1
    %p117 = scmp.eq.s32.totalorder %s16, 1
    %p118 = scmp.ne.s32.totalorder %s113, %s115
    %p119 = scmp.eq.s32.totalorder %s16, 0
    %p120 = por %p118, %p119
    %p121 = scmp.ne.s32.totalorder %s113, %s115
    %p122 = scmp.eq.s32.totalorder %s21, 1
    %p123 = por %p121, %p122
    %p124 = scmp.ne.s32.totalorder %s115, %s116
    %p125 = scmp.eq.s32.totalorder %s21, 0
    %p126 = por %p124, %p125
    %p127 = scmp.ne.s32.totalorder %s115, %s116
    %p128 = scmp.eq.s32.totalorder %s22, 1
    %p129 = por %p127, %p128
    %p131 = scmp.ne.s32.totalorder %s116, %s130
    %p132 = scmp.eq.s32.totalorder %s22, 0
    %p133 = por %p131, %p132
    %s135 = sadd.s32 %s134, 1
    %p138 = scmp.eq.s32.totalorder %s16, 1
    %p139 = scmp.ne.s32.totalorder %s134, %s136
    %p140 = scmp.eq.s32.totalorder %s16, 0
    %p141 = por %p139, %p140
    %p142 = scmp.ne.s32.totalorder %s134, %s136
    %p143 = scmp.eq.s32.totalorder %s21, 1
    %p144 = por %p142, %p143
    %p145 = scmp.ne.s32.totalorder %s136, %s137
    %p146 = scmp.eq.s32.totalorder %s21, 0
    %p147 = por %p145, %p146
    %p148 = scmp.ne.s32.totalorder %s136, %s137
    %p149 = scmp.eq.s32.totalorder %s22, 1
    %p150 = por %p148, %p149
    %p152 = scmp.ne.s32.totalorder %s137, %s151
    %p153 = scmp.eq.s32.totalorder %s22, 0
    %p154 = por %p152, %p153
    %s156 = sadd.s32 %s155, 1
    %p159 = scmp.eq.s32.totalorder %s16, 1
    %p160 = scmp.ne.s32.totalorder %s155, %s157
    %p161 = scmp.eq.s32.totalorder %s16, 0
    %p162 = por %p160, %p161
    %p163 = scmp.ne.s32.totalorder %s155, %s157
    %p164 = scmp.eq.s32.totalorder %s21, 1
    %p165 = por %p163, %p164
    %p166 = scmp.ne.s32.totalorder %s157, %s158
    %p167 = scmp.eq.s32.totalorder %s21, 0
    %p168 = por %p166, %p167
    %p169 = scmp.ne.s32.totalorder %s157, %s158
    %p170 = scmp.eq.s32.totalorder %s22, 1
    %p171 = por %p169, %p170
    %p173 = scmp.ne.s32.totalorder %s158, %s172
    %p174 = scmp.eq.s32.totalorder %s22, 0
    %p175 = por %p173, %p174
    %s177 = sadd.s32 %s176, 1
    %p180 = scmp.eq.s32.totalorder %s16, 1
    %p181 = scmp.ne.s32.totalorder %s176, %s178
    %p182 = scmp.eq.s32.totalorder %s16, 0
    %p183 = por %p181, %p182
    %p184 = scmp.ne.s32.totalorder %s176, %s178
    %p185 = scmp.eq.s32.totalorder %s21, 1
    %p186 = por %p184, %p185
    %p187 = scmp.ne.s32.totalorder %s178, %s179
    %p188 = scmp.eq.s32.totalorder %s21, 0
    %p189 = por %p187, %p188
    %p190 = scmp.ne.s32.totalorder %s178, %s179
    %p191 = scmp.eq.s32.totalorder %s22, 1
    %p192 = por %p190, %p191
    %p194 = scmp.ne.s32.totalorder %s179, %s193
    %p195 = scmp.eq.s32.totalorder %s22, 0
    %p196 = por %p194, %p195
    %s197 = ssub.s32 %s16, %s23
    %p198 = scmp.eq.s32.totalorder %s197, 0
    %s200 = sadd.s32 %s199, 1
    %s201 = scalar_select %p198, %s199, %s200
    %p204 = pneg %p198
    %p205 = scmp.eq.s32.totalorder %s16, 1
    %p206 = por %p204, %p205
    %p207 = scmp.ne.s32.totalorder %s199, %s202
    %p208 = scmp.eq.s32.totalorder %s16, 0
    %p209 = por %p207, %p208
    %p210 = scmp.ne.s32.totalorder %s199, %s202
    %p211 = scmp.eq.s32.totalorder %s21, 1
    %p212 = por %p210, %p211
    %p213 = scmp.ne.s32.totalorder %s202, %s203
    %p214 = scmp.eq.s32.totalorder %s21, 0
    %p215 = por %p213, %p214
    %p216 = scmp.ne.s32.totalorder %s202, %s203
    %p217 = scmp.eq.s32.totalorder %s22, 1
    %p218 = por %p216, %p217
    %p220 = scmp.ne.s32.totalorder %s203, %s219
    %p221 = scmp.eq.s32.totalorder %s22, 0
    %p222 = por %p220, %p221
    %s223 = ssub.s32 %s16, %s23
    %p224 = scmp.eq.s32.totalorder %s223, 0
    %s226 = sadd.s32 %s225, 1
    %s227 = scalar_select %p224, %s225, %s226
    %p230 = pneg %p224
    %p231 = scmp.eq.s32.totalorder %s16, 1
    %p232 = por %p230, %p231
    %p233 = scmp.ne.s32.totalorder %s225, %s228
    %p234 = scmp.eq.s32.totalorder %s16, 0
    %p235 = por %p233, %p234
    %p236 = scmp.ne.s32.totalorder %s225, %s228
    %p237 = scmp.eq.s32.totalorder %s21, 1
    %p238 = por %p236, %p237
    %p239 = scmp.ne.s32.totalorder %s228, %s229
    %p240 = scmp.eq.s32.totalorder %s21, 0
    %p241 = por %p239, %p240
    %p242 = scmp.ne.s32.totalorder %s228, %s229
    %p243 = scmp.eq.s32.totalorder %s22, 1
    %p244 = por %p242, %p243
    %p246 = scmp.ne.s32.totalorder %s229, %s245
    %p247 = scmp.eq.s32.totalorder %s22, 0
    %p248 = por %p246, %p247
    %p249 = scmp.le.s32.totalorder 1, %s16
    %p250 = scmp.lt.s32.totalorder %s16, 3
    %p251 = pnand %p249, %p250
    %p252 = pneg %p251
    // Predicated region
    $region9: #{cnn_forward.1} parent=5 // pred_check
      _
    $region10: #{cnn_forward.1} parent=5 // pred_check_branch
      %254 = sbr.rel (%p251) target = $region12
    $region11: #{cnn_forward.1} parent=5 // pred_region
      %s255 = ssub.s32 %s16, 1
      // Predicated region
      $region13: #{cnn_forward.1} parent=11 // pred_check
        %p256 = pneg %p63
      $region14: #{cnn_forward.1} parent=11 // pred_check_branch
        %258 = sbr.rel (%p256) target = $region16
      $region15: #{cnn_forward.1} parent=11 // pred_region
        _
      $region16: #{cnn_forward.1} parent=11 // pred_fallthru
        _
      // Predicated region
      $region17: #{cnn_forward.1} parent=11 // pred_check
        %p259 = pneg %p84
      $region18: #{cnn_forward.1} parent=11 // pred_check_branch
        %261 = sbr.rel (%p259) target = $region20
      $region19: #{cnn_forward.1} parent=11 // pred_region
        _
      $region20: #{cnn_forward.1} parent=11 // pred_fallthru
        _
      // Predicated region
      $region21: #{cnn_forward.1} parent=11 // pred_check
        %p262 = pneg %p105
      $region22: #{cnn_forward.1} parent=11 // pred_check_branch
        %264 = sbr.rel (%p262) target = $region24
      $region23: #{cnn_forward.1} parent=11 // pred_region
        _
      $region24: #{cnn_forward.1} parent=11 // pred_fallthru
        _
      // Predicated region
      $region25: #{cnn_forward.1} parent=11 // pred_check
        %p265 = pneg %p126
      $region26: #{cnn_forward.1} parent=11 // pred_check_branch
        %267 = sbr.rel (%p265) target = $region28
      $region27: #{cnn_forward.1} parent=11 // pred_region
        _
      $region28: #{cnn_forward.1} parent=11 // pred_fallthru
        _
      // Predicated region
      $region29: #{cnn_forward.1} parent=11 // pred_check
        %p268 = pneg %p147
      $region30: #{cnn_forward.1} parent=11 // pred_check_branch
        %270 = sbr.rel (%p268) target = $region32
      $region31: #{cnn_forward.1} parent=11 // pred_region
        _
      $region32: #{cnn_forward.1} parent=11 // pred_fallthru
        _
      // Predicated region
      $region33: #{cnn_forward.1} parent=11 // pred_check
        %p271 = pneg %p168
      $region34: #{cnn_forward.1} parent=11 // pred_check_branch
        %273 = sbr.rel (%p271) target = $region36
      $region35: #{cnn_forward.1} parent=11 // pred_region
        _
      $region36: #{cnn_forward.1} parent=11 // pred_fallthru
        _
      // Predicated region
      $region37: #{cnn_forward.1} parent=11 // pred_check
        %p274 = pneg %p189
      $region38: #{cnn_forward.1} parent=11 // pred_check_branch
        %276 = sbr.rel (%p274) target = $region40
      $region39: #{cnn_forward.1} parent=11 // pred_region
        _
      $region40: #{cnn_forward.1} parent=11 // pred_fallthru
        _
    $region12: #{cnn_forward.1} parent=5 // pred_fallthru
      _
    %p277 = scmp.lt.s32.totalorder %s16, 2
    // Predicated region
    $region41: #{cnn_forward.1} parent=5 // pred_check
      %p278 = pneg %p277
    $region42: #{cnn_forward.1} parent=5 // pred_check_branch
      %280 = sbr.rel (%p278) target = $region44
    $region43: #{cnn_forward.1} parent=5 // pred_region
      // Predicated region
      $region45: #{cnn_forward.1} parent=43 // pred_check
        %p281 = pneg %p36
      $region46: #{cnn_forward.1} parent=43 // pred_check_branch
        %283 = sbr.rel (%p281) target = $region48
      $region47: #{cnn_forward.1} parent=43 // pred_region
        %p284 = scmp.lt.s32.totalorder %s16, 1
        %s285 = scalar_select %p284, %s16, 1
        %s286 = smul.addr %s285, 3
        %s287 = smul.addr %s286, 8
        %s288 = scalar_lea.vmem %s0, %s287
      $region48: #{cnn_forward.1} parent=43 // pred_fallthru
        _
    $region44: #{cnn_forward.1} parent=5 // pred_fallthru
      _
    %p289 = scmp.le.s32.totalorder 1, %s16
    %p290 = scmp.lt.s32.totalorder %s16, 3
    %p291 = pnand %p289, %p290
    %p292 = pneg %p291
    // Predicated region
    $region49: #{cnn_forward.1} parent=5 // pred_check
      _
    $region50: #{cnn_forward.1} parent=5 // pred_check_branch
      %294 = sbr.rel (%p291) target = $region52
    $region51: #{cnn_forward.1} parent=5 // pred_region
      %s295 = ssub.s32 %s16, 1
      %p296 = scmp.lt.s32.totalorder %s21, 1
      %s297 = scalar_select %p296, %s21, 1
      %s298 = smul.addr %s297, 3
      %s299 = smul.addr %s298, 8
      %s300 = scalar_lea.vmem %s0, %s299
      %p301 = pneg %p42
      %p302 = pneg %p39
      %p303 = pneg %p63
      %p304 = pneg %p60
      %p305 = pneg %p84
      %p306 = pneg %p81
      %p307 = pneg %p105
      %p308 = pneg %p102
      %p309 = pneg %p126
      %p310 = pneg %p123
      %p311 = pneg %p147
      %p312 = pneg %p144
      %p313 = pneg %p168
      %p314 = pneg %p165
      %p315 = pneg %p189
      %p316 = pneg %p186
      %p317 = pneg %p215
      %p318 = pneg %p212
      %p319 = scmp.lt.s32.totalorder %s21, 1
      %s320 = scalar_select %p319, %s21, 1
      %s321 = smul.addr %s320, 8
      %s322 = scalar_lea.vmem %s8, %s321
      %p323 = pneg %p241
      %p324 = pneg %p238
      %p325 = scmp.lt.s32.totalorder %s21, 1
      %s326 = scalar_select %p325, %s21, 1
      %s327 = smul.addr %s326, 3
      %s328 = scalar_lea.vmem %s9, %s327
      %p329 = scmp.lt.s32.totalorder %s21, 1
      %s330 = scalar_select %p329, %s21, 1
      %s331 = smul.addr %s330, 3
      %s332 = smul.addr %s331, 8
      %s333 = scalar_lea.vmem %s0, %s332
      %p334 = scmp.lt.s32.totalorder %s21, 1
      %s335 = scalar_select %p334, %s21, 1
      %s336 = smul.addr %s335, 8
      %s337 = scalar_lea.vmem %s8, %s336
      %p338 = scmp.lt.s32.totalorder %s21, 1
      %s339 = scalar_select %p338, %s21, 1
      %s340 = smul.addr %s339, 3
      %s341 = scalar_lea.vmem %s9, %s340
      %v342 = vld [vmem:[%s333] sm:$0xff]
      %v343 = vld [vmem:[%s333 + $0x8] sm:$0xff]
      %v344 = vld [vmem:[%s333 + $0x10] sm:$0xff]
      %v345 = vld [vmem:[%s1] sm:$0xff]
      %349 = vrot.lane.b32.xlu0 %v342, 127
      %v350 = vpop.permute.xlu0 %349
      %351 = vrot.lane.b32.xlu0 %v343, 127
      %v352 = vpop.permute.xlu0 %351
      %353 = vrot.lane.b32.xlu0 %v344, 127
      %v354 = vpop.permute.xlu0 %353
      %vm355 = vcmask 1039360
      %v356 = vsel %vm355, %v350, %v352
      %v357 = vsel %vm355, %v352, %v354
      %361 = vrot.lane.b32.xlu0 %v342, 67
      %v362 = vpop.permute.xlu0 %361
      %vm364 = vcmask 547840
      %v365 = vsel %vm364, %v354, %v362
      %366 = vrot.lane.b32.xlu0 %v342, 126
      %v367 = vpop.permute.xlu0 %366
      %368 = vrot.lane.b32.xlu0 %v343, 126
      %v369 = vpop.permute.xlu0 %368
      %370 = vrot.lane.b32.xlu0 %v344, 126
      %v371 = vpop.permute.xlu0 %370
      %vm372 = vcmask 1031168
      %v373 = vsel %vm372, %v367, %v369
      %v374 = vsel %vm372, %v369, %v371
      %378 = vrot.lane.b32.xlu0 %v342, 66
      %v379 = vpop.permute.xlu0 %378
      %vm381 = vcmask 539648
      %v382 = vsel %vm381, %v371, %v379
      %383 = vrot.lane.b32.xlu0 %v342, 110
      %v384 = vpop.permute.xlu0 %383
      %385 = vrot.lane.b32.xlu0 %v343, 110
      %v386 = vpop.permute.xlu0 %385
      %387 = vrot.lane.b32.xlu0 %v344, 110
      %v388 = vpop.permute.xlu0 %387
      %vm389 = vcmask 900096
      %v390 = vsel %vm389, %v384, %v386
      %v391 = vsel %vm389, %v386, %v388
      %395 = vrot.lane.b32.xlu0 %v342, 50
      %v396 = vpop.permute.xlu0 %395
      %vm398 = vcmask 408576
      %v399 = vsel %vm398, %v388, %v396
      %400 = vrot.lane.b32.xlu0 %v342, 109
      %v401 = vpop.permute.xlu0 %400
      %402 = vrot.lane.b32.xlu0 %v343, 109
      %v403 = vpop.permute.xlu0 %402
      %404 = vrot.lane.b32.xlu0 %v344, 109
      %v405 = vpop.permute.xlu0 %404
      %vm406 = vcmask 891904
      %v407 = vsel %vm406, %v401, %v403
      %v408 = vsel %vm406, %v403, %v405
      %412 = vrot.lane.b32.xlu0 %v342, 49
      %v413 = vpop.permute.xlu0 %412
      %vm415 = vcmask 400384
      %v416 = vsel %vm415, %v405, %v413
      %417 = vrot.lane.b32.xlu0 %v342, 108
      %v418 = vpop.permute.xlu0 %417
      %419 = vrot.lane.b32.xlu0 %v343, 108
      %v420 = vpop.permute.xlu0 %419
      %421 = vrot.lane.b32.xlu0 %v344, 108
      %v422 = vpop.permute.xlu0 %421
      %vm423 = vcmask 883712
      %v424 = vsel %vm423, %v418, %v420
      %v425 = vsel %vm423, %v420, %v422
      %429 = vrot.lane.b32.xlu0 %v342, 48
      %v430 = vpop.permute.xlu0 %429
      %vm432 = vcmask 392192
      %v433 = vsel %vm432, %v422, %v430
      %434 = vrot.lane.b32.xlu0 %v342, 92
      %v435 = vpop.permute.xlu0 %434
      %436 = vrot.lane.b32.xlu0 %v343, 92
      %v437 = vpop.permute.xlu0 %436
      %438 = vrot.lane.b32.xlu0 %v344, 92
      %v439 = vpop.permute.xlu0 %438
      %vm440 = vcmask 752640
      %v441 = vsel %vm440, %v435, %v437
      %v442 = vsel %vm440, %v437, %v439
      %446 = vrot.lane.b32.xlu0 %v342, 32
      %v447 = vpop.permute.xlu0 %446
      %vm449 = vcmask 261120
      %v450 = vsel %vm449, %v439, %v447
      %451 = vrot.lane.b32.xlu0 %v342, 91
      %v452 = vpop.permute.xlu0 %451
      %453 = vrot.lane.b32.xlu0 %v343, 91
      %v454 = vpop.permute.xlu0 %453
      %455 = vrot.lane.b32.xlu0 %v344, 91
      %v456 = vpop.permute.xlu0 %455
      %vm457 = vcmask 744448
      %v458 = vsel %vm457, %v452, %v454
      %v459 = vsel %vm457, %v454, %v456
      %463 = vrot.lane.b32.xlu0 %v342, 31
      %v464 = vpop.permute.xlu0 %463
      %vm466 = vcmask 252928
      %v467 = vsel %vm466, %v456, %v464
      %468 = vrot.lane.b32.xlu0 %v342, 90
      %v469 = vpop.permute.xlu0 %468
      %470 = vrot.lane.b32.xlu0 %v343, 90
      %v471 = vpop.permute.xlu0 %470
      %472 = vrot.lane.b32.xlu0 %v344, 90
      %v473 = vpop.permute.xlu0 %472
      %vm474 = vcmask 736256
      %v475 = vsel %vm474, %v469, %v471
      %v476 = vsel %vm474, %v471, %v473
      %480 = vrot.lane.b32.xlu0 %v342, 30
      %v481 = vpop.permute.xlu0 %480
      %vm483 = vcmask 244736
      %v484 = vsel %vm483, %v473, %v481
      %vm485 = vcmask 588800
      %v487 = vsel %vm485, %v345, 0
      %489 = vmatpush.msra.mxu0 0.0
      %490 = vmatpush.msra.mxu0 0.0
      %491 = vmatpush.msra.mxu0 0.0
      %492 = vmatpush.msra.mxu0 0.0
      %493 = vmatpush.msra.mxu0 0.0
      %494 = vmatpush.msra.mxu0 0.0
      %495 = vmatpush.msra.mxu0 0.0
      %496 = vmatpush.msra.mxu0 %v475
      %497 = vmatpush.msra.mxu0 %v458
      %498 = vmatpush.msra.mxu0 %v441
      %499 = vmatpush.msra.mxu0 %v424
      %500 = vmatpush.msra.mxu0 %v407
      %501 = vmatpush.msra.mxu0 %v390
      %502 = vmatpush.msra.mxu0 %v373
      %503 = vmatpush.msra.mxu0 %v356
      %504 = vmatpush.msra.mxu0 %v342
      %505 = vmatmul.f32.gmra.mxu0 %v487
      %v506 = vpop.f32.mrf.mxu0
      %v507 = vadd.f32 0.0, %v506
      %508 = vdwg.mxu0
      %509 = vmatpush.msra.mxu0 0.0
      %510 = vmatpush.msra.mxu0 0.0
      %511 = vmatpush.msra.mxu0 0.0
      %512 = vmatpush.msra.mxu0 0.0
      %513 = vmatpush.msra.mxu0 0.0
      %514 = vmatpush.msra.mxu0 0.0
      %515 = vmatpush.msra.mxu0 0.0
      %516 = vmatpush.msra.mxu0 %v476
      %517 = vmatpush.msra.mxu0 %v459
      %518 = vmatpush.msra.mxu0 %v442
      %519 = vmatpush.msra.mxu0 %v425
      %520 = vmatpush.msra.mxu0 %v408
      %521 = vmatpush.msra.mxu0 %v391
      %522 = vmatpush.msra.mxu0 %v374
      %523 = vmatpush.msra.mxu0 %v357
      %524 = vmatpush.msra.mxu0 %v343
      %525 = vmatmul.f32.gmra.mxu0 %v487
      %v526 = vpop.f32.mrf.mxu0
      %v527 = vadd.f32 0.0, %v526
      %528 = vdwg.mxu0
      %529 = vmatpush.msra.mxu0 0.0
      %530 = vmatpush.msra.mxu0 0.0
      %531 = vmatpush.msra.mxu0 0.0
      %532 = vmatpush.msra.mxu0 0.0
      %533 = vmatpush.msra.mxu0 0.0
      %534 = vmatpush.msra.mxu0 0.0
      %535 = vmatpush.msra.mxu0 0.0
      %536 = vmatpush.msra.mxu0 %v484
      %537 = vmatpush.msra.mxu0 %v467
      %538 = vmatpush.msra.mxu0 %v450
      %539 = vmatpush.msra.mxu0 %v433
      %540 = vmatpush.msra.mxu0 %v416
      %541 = vmatpush.msra.mxu0 %v399
      %542 = vmatpush.msra.mxu0 %v382
      %543 = vmatpush.msra.mxu0 %v365
      %544 = vmatpush.msra.mxu0 %v344
      %545 = vmatmul.f32.gmra.mxu0 %v487
      %v546 = vpop.f32.mrf.mxu0
      %v547 = vadd.f32 0.0, %v546
      %548 = vdwg.mxu0
      %552 = vrot.lane.b32.xlu0 %v507, 127
      %v553 = vpop.permute.xlu0 %552
      %554 = vrot.lane.b32.xlu0 %v527, 127
      %v555 = vpop.permute.xlu0 %554
      %556 = vrot.lane.b32.xlu0 %v547, 127
      %v557 = vpop.permute.xlu0 %556
      %v558 = vsel %vm355, %v553, %v555
      %v559 = vsel %vm355, %v555, %v557
      %563 = vrot.lane.b32.xlu0 %v507, 67
      %v564 = vpop.permute.xlu0 %563
      %v566 = vsel %vm364, %v557, %v564
      %v567 = vmax.f32 %v507, %v558
      %v568 = vmax.f32 %v527, %v559
      %v569 = vmax.f32 %v547, %v566
      %570 = vrot.lane.b32.xlu0 %v507, 110
      %v571 = vpop.permute.xlu0 %570
      %572 = vrot.lane.b32.xlu0 %v527, 110
      %v573 = vpop.permute.xlu0 %572
      %574 = vrot.lane.b32.xlu0 %v547, 110
      %v575 = vpop.permute.xlu0 %574
      %v576 = vsel %vm389, %v571, %v573
      %v577 = vsel %vm389, %v573, %v575
      %581 = vrot.lane.b32.xlu0 %v507, 50
      %v582 = vpop.permute.xlu0 %581
      %v584 = vsel %vm398, %v575, %v582
      %585 = vrot.lane.b32.xlu0 %v507, 109
      %v586 = vpop.permute.xlu0 %585
      %587 = vrot.lane.b32.xlu0 %v527, 109
      %v588 = vpop.permute.xlu0 %587
      %589 = vrot.lane.b32.xlu0 %v547, 109
      %v590 = vpop.permute.xlu0 %589
      %v591 = vsel %vm406, %v586, %v588
      %v592 = vsel %vm406, %v588, %v590
      %596 = vrot.lane.b32.xlu0 %v507, 49
      %v597 = vpop.permute.xlu0 %596
      %v599 = vsel %vm415, %v590, %v597
      %v600 = vmax.f32 %v576, %v591
      %v601 = vmax.f32 %v577, %v592
      %v602 = vmax.f32 %v584, %v599
      %v603 = vmax.f32 %v567, %v600
      %v604 = vmax.f32 %v568, %v601
      %v605 = vmax.f32 %v569, %v602
      %v606 = vld [vmem:[%s1 + $0x30] sm:$0xff]
      %608 = vset.pattern.permute.xlu0 0
      %609 = vperm.xlu0 %608, %v606
      %v610 = vpop.permute.xlu0 %609
      %v612 = vadd.f32 %v603, %v610
      %v613 = vadd.f32 %v604, %v610
      %v614 = vadd.f32 %v605, %v610
      %v615 = vld [vmem:[%s2] sm:$0xff]
      %v616 = vld [vmem:[%s2 + $0x8] sm:$0xff]
      %v617 = vld [vmem:[%s2 + $0x10] sm:$0xff]
      %v618 = vld [vmem:[%s2 + $0x18] sm:$0xff]
      %v619 = vld [vmem:[%s2 + $0x20] sm:$0xff]
      %v620 = vld [vmem:[%s2 + $0x28] sm:$0xff]
      %v621 = vld [vmem:[%s2 + $0x30] sm:$0xff]
      %v622 = vld [vmem:[%s2 + $0x38] sm:$0xff]
      %v623 = vld [vmem:[%s2 + $0x40] sm:$0xff]
      %v624 = vld [vmem:[%s2 + $0x48] sm:$0xff]
      %v625 = vld [vmem:[%s2 + $0x50] sm:$0xff]
      %v626 = vld [vmem:[%s2 + $0x58] sm:$0xff]
      %v627 = vld [vmem:[%s2 + $0x60] sm:$0xff]
      %v628 = vld [vmem:[%s2 + $0x68] sm:$0xff]
      %v629 = vld [vmem:[%s2 + $0x70] sm:$0xff]
      %v630 = vld [vmem:[%s2 + $0x78] sm:$0xff]
      %v631 = vld [vmem:[%s2 + $0x80] sm:$0xff]
      %v632 = vld [vmem:[%s2 + $0x88] sm:$0xff]
      %v633 = vld [vmem:[%s2 + $0x90] sm:$0xff]
      %v634 = vld [vmem:[%s2 + $0x98] sm:$0xff]
      %v635 = vld [vmem:[%s2 + $0xa0] sm:$0xff]
      %v636 = vld [vmem:[%s2 + $0xa8] sm:$0xff]
      %v637 = vld [vmem:[%s2 + $0xb0] sm:$0xff]
      %v638 = vld [vmem:[%s2 + $0xb8] sm:$0xff]
      %v639 = vld [vmem:[%s2 + $0xc0] sm:$0xff]
      %v640 = vld [vmem:[%s2 + $0xc8] sm:$0xff]
      %v641 = vld [vmem:[%s2 + $0xd0] sm:$0xff]
      %v642 = vld [vmem:[%s2 + $0xd8] sm:$0xff]
      %v643 = vld [vmem:[%s2 + $0xe0] sm:$0xff]
      %v644 = vld [vmem:[%s2 + $0xe8] sm:$0xff]
      %v645 = vld [vmem:[%s2 + $0xf0] sm:$0xff]
      %v646 = vld [vmem:[%s2 + $0xf8] sm:$0xff]
      %v647 = vld [vmem:[%s2 + $0x100] sm:$0xff]
      %v648 = vld [vmem:[%s2 + $0x108] sm:$0xff]
      %v649 = vld [vmem:[%s2 + $0x110] sm:$0xff]
      %v650 = vld [vmem:[%s2 + $0x118] sm:$0xff]
      %v651 = vld [vmem:[%s2 + $0x120] sm:$0xff]
      %v652 = vld [vmem:[%s2 + $0x128] sm:$0xff]
      %v653 = vld [vmem:[%s2 + $0x130] sm:$0xff]
      %v654 = vld [vmem:[%s2 + $0x138] sm:$0xff]
      %v655 = vld [vmem:[%s2 + $0x140] sm:$0xf]
      %vm656 = vcmask 556032
      %v658 = vsel %vm656, %v614, 0
      %vm660 = vcmask 1043456
      %v662 = vsel %vm660, %v655, 0
      %664 = vmatpush.msra.mxu0 %v630
      %665 = vmatpush.msra.mxu0 %v629
      %666 = vmatpush.msra.mxu0 %v628
      %667 = vmatpush.msra.mxu0 %v627
      %668 = vmatpush.msra.mxu0 %v626
      %669 = vmatpush.msra.mxu0 %v625
      %670 = vmatpush.msra.mxu0 %v624
      %671 = vmatpush.msra.mxu0 %v623
      %672 = vmatpush.msra.mxu0 %v622
      %673 = vmatpush.msra.mxu0 %v621
      %674 = vmatpush.msra.mxu0 %v620
      %675 = vmatpush.msra.mxu0 %v619
      %676 = vmatpush.msra.mxu0 %v618
      %677 = vmatpush.msra.mxu0 %v617
      %678 = vmatpush.msra.mxu0 %v616
      %679 = vmatpush.msra.mxu0 %v615
      %680 = vmatmul.f32.gmra.mxu0 %v612
      %v681 = vpop.f32.mrf.mxu0
      %v682 = vadd.f32 0.0, %v681
      %683 = vdwg.mxu0
      %684 = vmatpush.msra.mxu0 %v646
      %685 = vmatpush.msra.mxu0 %v645
      %686 = vmatpush.msra.mxu0 %v644
      %687 = vmatpush.msra.mxu0 %v643
      %688 = vmatpush.msra.mxu0 %v642
      %689 = vmatpush.msra.mxu0 %v641
      %690 = vmatpush.msra.mxu0 %v640
      %691 = vmatpush.msra.mxu0 %v639
      %692 = vmatpush.msra.mxu0 %v638
      %693 = vmatpush.msra.mxu0 %v637
      %694 = vmatpush.msra.mxu0 %v636
      %695 = vmatpush.msra.mxu0 %v635
      %696 = vmatpush.msra.mxu0 %v634
      %697 = vmatpush.msra.mxu0 %v633
      %698 = vmatpush.msra.mxu0 %v632
      %699 = vmatpush.msra.mxu0 %v631
      %700 = vmatmul.f32.gmra.mxu0 %v613
      %v701 = vpop.f32.mrf.mxu0
      %v702 = vadd.f32 %v682, %v701
      %703 = vdwg.mxu0
      %704 = vmatpush.msra.mxu0 0.0
      %705 = vmatpush.msra.mxu0 0.0
      %706 = vmatpush.msra.mxu0 0.0
      %707 = vmatpush.msra.mxu0 0.0
      %708 = vmatpush.msra.mxu0 0.0
      %709 = vmatpush.msra.mxu0 0.0
      %710 = vmatpush.msra.mxu0 0.0
      %711 = vmatpush.msra.mxu0 %v662
      %712 = vmatpush.msra.mxu0 %v654
      %713 = vmatpush.msra.mxu0 %v653
      %714 = vmatpush.msra.mxu0 %v652
      %715 = vmatpush.msra.mxu0 %v651
      %716 = vmatpush.msra.mxu0 %v650
      %717 = vmatpush.msra.mxu0 %v649
      %718 = vmatpush.msra.mxu0 %v648
      %719 = vmatpush.msra.mxu0 %v647
      %720 = vmatmul.f32.gmra.mxu0 %v658
      %v721 = vpop.f32.mrf.mxu0
      %v722 = vadd.f32 %v702, %v721
      %723 = vdwg.mxu0
      %v724 = vtanh.pop %v722
      %v725 = vld [vmem:[%s1 + $0x8] sm:$0xff]
      %727 = vrot.lane.b32.xlu0 %v724, 127
      %v728 = vpop.permute.xlu0 %727
      %730 = vrot.lane.b32.xlu0 %v724, 99
      %v731 = vpop.permute.xlu0 %730
      %vm733 = vcmask 809984
      %v734 = vsel %vm733, %v728, %v731
      %735 = vrot.lane.b32.xlu0 %v724, 126
      %v736 = vpop.permute.xlu0 %735
      %738 = vrot.lane.b32.xlu0 %v724, 98
      %v739 = vpop.permute.xlu0 %738
      %vm741 = vcmask 801792
      %v742 = vsel %vm741, %v736, %v739
      %743 = vrot.lane.b32.xlu0 %v724, 118
      %v744 = vpop.permute.xlu0 %743
      %746 = vrot.lane.b32.xlu0 %v724, 90
      %v747 = vpop.permute.xlu0 %746
      %v749 = vsel %vm474, %v744, %v747
      %750 = vrot.lane.b32.xlu0 %v724, 117
      %v751 = vpop.permute.xlu0 %750
      %753 = vrot.lane.b32.xlu0 %v724, 89
      %v754 = vpop.permute.xlu0 %753
      %vm756 = vcmask 728064
      %v757 = vsel %vm756, %v751, %v754
      %758 = vrot.lane.b32.xlu0 %v724, 116
      %v759 = vpop.permute.xlu0 %758
      %761 = vrot.lane.b32.xlu0 %v724, 88
      %v762 = vpop.permute.xlu0 %761
      %vm764 = vcmask 719872
      %v765 = vsel %vm764, %v759, %v762
      %766 = vrot.lane.b32.xlu0 %v724, 108
      %v767 = vpop.permute.xlu0 %766
      %769 = vrot.lane.b32.xlu0 %v724, 80
      %v770 = vpop.permute.xlu0 %769
      %vm772 = vcmask 654336
      %v773 = vsel %vm772, %v767, %v770
      %774 = vrot.lane.b32.xlu0 %v724, 107
      %v775 = vpop.permute.xlu0 %774
      %777 = vrot.lane.b32.xlu0 %v724, 79
      %v778 = vpop.permute.xlu0 %777
      %vm780 = vcmask 646144
      %v781 = vsel %vm780, %v775, %v778
      %782 = vrot.lane.b32.xlu0 %v724, 106
      %v783 = vpop.permute.xlu0 %782
      %785 = vrot.lane.b32.xlu0 %v724, 78
      %v786 = vpop.permute.xlu0 %785
      %vm788 = vcmask 637952
      %v789 = vsel %vm788, %v783, %v786
      %v791 = vsel %vm485, %v725, 0
      %793 = vmatpush.msra.mxu0 0.0
      %794 = vmatpush.msra.mxu0 0.0
      %795 = vmatpush.msra.mxu0 0.0
      %796 = vmatpush.msra.mxu0 0.0
      %797 = vmatpush.msra.mxu0 0.0
      %798 = vmatpush.msra.mxu0 0.0
      %799 = vmatpush.msra.mxu0 0.0
      %800 = vmatpush.msra.mxu0 %v789
      %801 = vmatpush.msra.mxu0 %v781
      %802 = vmatpush.msra.mxu0 %v773
      %803 = vmatpush.msra.mxu0 %v765
      %804 = vmatpush.msra.mxu0 %v757
      %805 = vmatpush.msra.mxu0 %v749
      %806 = vmatpush.msra.mxu0 %v742
      %807 = vmatpush.msra.mxu0 %v734
      %808 = vmatpush.msra.mxu0 %v724
      %809 = vmatmul.f32.gmra.mxu0 %v791
      %v810 = vpop.f32.mrf.mxu0
      %v811 = vadd.f32 0.0, %v810
      %812 = vdwg.mxu0
      %814 = vrot.lane.b32.xlu0 %v811, 127
      %v815 = vpop.permute.xlu0 %814
      %817 = vrot.lane.b32.xlu0 %v811, 99
      %v818 = vpop.permute.xlu0 %817
      %v820 = vsel %vm733, %v815, %v818
      %v821 = vmax.f32 %v811, %v820
      %822 = vrot.lane.b32.xlu0 %v811, 118
      %v823 = vpop.permute.xlu0 %822
      %825 = vrot.lane.b32.xlu0 %v811, 90
      %v826 = vpop.permute.xlu0 %825
      %v828 = vsel %vm474, %v823, %v826
      %829 = vrot.lane.b32.xlu0 %v811, 117
      %v830 = vpop.permute.xlu0 %829
      %832 = vrot.lane.b32.xlu0 %v811, 89
      %v833 = vpop.permute.xlu0 %832
      %v835 = vsel %vm756, %v830, %v833
      %v836 = vmax.f32 %v828, %v835
      %v837 = vmax.f32 %v821, %v836
      %838 = vset.pattern.permute.xlu0 1
      %839 = vperm.xlu0 %838, %v606
      %v840 = vpop.permute.xlu0 %839
      %v842 = vadd.f32 %v837, %v840
      %v843 = vld [vmem:[%s3] sm:$0xff]
      %v844 = vld [vmem:[%s3 + $0x8] sm:$0xff]
      %v845 = vld [vmem:[%s3 + $0x10] sm:$0xff]
      %v846 = vld [vmem:[%s3 + $0x18] sm:$0xff]
      %v847 = vld [vmem:[%s3 + $0x20] sm:$0xff]
      %v848 = vld [vmem:[%s3 + $0x28] sm:$0xff]
      %v849 = vld [vmem:[%s3 + $0x30] sm:$0xff]
      %v850 = vld [vmem:[%s3 + $0x38] sm:$0xff]
      %v851 = vld [vmem:[%s3 + $0x40] sm:$0xff]
      %v852 = vld [vmem:[%s3 + $0x48] sm:$0xff]
      %v853 = vld [vmem:[%s3 + $0x50] sm:$0xff]
      %v854 = vld [vmem:[%s3 + $0x58] sm:$0xff]
      %v855 = vld [vmem:[%s3 + $0x60] sm:$0xf]
      %vm856 = vcmask 818176
      %v858 = vsel %vm856, %v842, 0
      %v861 = vsel %vm660, %v855, 0
      %863 = vmatpush.msra.mxu0 0.0
      %864 = vmatpush.msra.mxu0 0.0
      %865 = vmatpush.msra.mxu0 0.0
      %866 = vmatpush.msra.mxu0 %v861
      %867 = vmatpush.msra.mxu0 %v854
      %868 = vmatpush.msra.mxu0 %v853
      %869 = vmatpush.msra.mxu0 %v852
      %870 = vmatpush.msra.mxu0 %v851
      %871 = vmatpush.msra.mxu0 %v850
      %872 = vmatpush.msra.mxu0 %v849
      %873 = vmatpush.msra.mxu0 %v848
      %874 = vmatpush.msra.mxu0 %v847
      %875 = vmatpush.msra.mxu0 %v846
      %876 = vmatpush.msra.mxu0 %v845
      %877 = vmatpush.msra.mxu0 %v844
      %878 = vmatpush.msra.mxu0 %v843
      %879 = vmatmul.f32.gmra.mxu0 %v858
      %v880 = vpop.f32.mrf.mxu0
      %v881 = vadd.f32 0.0, %v880
      %882 = vdwg.mxu0
      %v883 = vtanh.pop %v881
      %v884 = vld [vmem:[%s1 + $0x10] sm:$0xff]
      %886 = vrot.lane.b32.xlu0 %v883, 127
      %v887 = vpop.permute.xlu0 %886
      %889 = vrot.lane.b32.xlu0 %v883, 35
      %v890 = vpop.permute.xlu0 %889
      %vm892 = vcmask 285696
      %v893 = vsel %vm892, %v887, %v890
      %894 = vrot.lane.b32.xlu0 %v883, 126
      %v895 = vpop.permute.xlu0 %894
      %897 = vrot.lane.b32.xlu0 %v883, 34
      %v898 = vpop.permute.xlu0 %897
      %vm900 = vcmask 277504
      %v901 = vsel %vm900, %v895, %v898
      %902 = vrot.lane.b32.xlu0 %v883, 122
      %v903 = vpop.permute.xlu0 %902
      %905 = vrot.lane.b32.xlu0 %v883, 30
      %v906 = vpop.permute.xlu0 %905
      %v908 = vsel %vm483, %v903, %v906
      %909 = vrot.lane.b32.xlu0 %v883, 121
      %v910 = vpop.permute.xlu0 %909
      %912 = vrot.lane.b32.xlu0 %v883, 29
      %v913 = vpop.permute.xlu0 %912
      %vm915 = vcmask 236544
      %v916 = vsel %vm915, %v910, %v913
      %917 = vrot.lane.b32.xlu0 %v883, 120
      %v918 = vpop.permute.xlu0 %917
      %920 = vrot.lane.b32.xlu0 %v883, 28
      %v921 = vpop.permute.xlu0 %920
      %vm923 = vcmask 228352
      %v924 = vsel %vm923, %v918, %v921
      %925 = vrot.lane.b32.xlu0 %v883, 116
      %v926 = vpop.permute.xlu0 %925
      %928 = vrot.lane.b32.xlu0 %v883, 24
      %v929 = vpop.permute.xlu0 %928
      %vm931 = vcmask 195584
      %v932 = vsel %vm931, %v926, %v929
      %933 = vrot.lane.b32.xlu0 %v883, 115
      %v934 = vpop.permute.xlu0 %933
      %936 = vrot.lane.b32.xlu0 %v883, 23
      %v937 = vpop.permute.xlu0 %936
      %vm939 = vcmask 187392
      %v940 = vsel %vm939, %v934, %v937
      %941 = vrot.lane.b32.xlu0 %v883, 114
      %v942 = vpop.permute.xlu0 %941
      %944 = vrot.lane.b32.xlu0 %v883, 22
      %v945 = vpop.permute.xlu0 %944
      %vm947 = vcmask 179200
      %v948 = vsel %vm947, %v942, %v945
      %v950 = vsel %vm485, %v884, 0
      %952 = vmatpush.msra.mxu0 0.0
      %953 = vmatpush.msra.mxu0 0.0
      %954 = vmatpush.msra.mxu0 0.0
      %955 = vmatpush.msra.mxu0 0.0
      %956 = vmatpush.msra.mxu0 0.0
      %957 = vmatpush.msra.mxu0 0.0
      %958 = vmatpush.msra.mxu0 0.0
      %959 = vmatpush.msra.mxu0 %v948
      %960 = vmatpush.msra.mxu0 %v940
      %961 = vmatpush.msra.mxu0 %v932
      %962 = vmatpush.msra.mxu0 %v924
      %963 = vmatpush.msra.mxu0 %v916
      %964 = vmatpush.msra.mxu0 %v908
      %965 = vmatpush.msra.mxu0 %v901
      %966 = vmatpush.msra.mxu0 %v893
      %967 = vmatpush.msra.mxu0 %v883
      %968 = vmatmul.f32.gmra.mxu0 %v950
      %v969 = vpop.f32.mrf.mxu0
      %v970 = vadd.f32 0.0, %v969
      %971 = vdwg.mxu0
      %973 = vrot.lane.b32.xlu0 %v970, 127
      %v974 = vpop.permute.xlu0 %973
      %976 = vrot.lane.b32.xlu0 %v970, 35
      %v977 = vpop.permute.xlu0 %976
      %v979 = vsel %vm892, %v974, %v977
      %v980 = vmax.f32 %v970, %v979
      %981 = vrot.lane.b32.xlu0 %v970, 122
      %v982 = vpop.permute.xlu0 %981
      %984 = vrot.lane.b32.xlu0 %v970, 30
      %v985 = vpop.permute.xlu0 %984
      %v987 = vsel %vm483, %v982, %v985
      %988 = vrot.lane.b32.xlu0 %v970, 121
      %v989 = vpop.permute.xlu0 %988
      %991 = vrot.lane.b32.xlu0 %v970, 29
      %v992 = vpop.permute.xlu0 %991
      %v994 = vsel %vm915, %v989, %v992
      %v995 = vmax.f32 %v987, %v994
      %v996 = vmax.f32 %v980, %v995
      %997 = vset.pattern.permute.xlu0 2
      %998 = vperm.xlu0 %997, %v606
      %v999 = vpop.permute.xlu0 %998
      %v1001 = vadd.f32 %v996, %v999
      %v1002 = vld [vmem:[%s4] sm:$0xff]
      %v1003 = vld [vmem:[%s4 + $0x8] sm:$0xff]
      %v1004 = vld [vmem:[%s4 + $0x10] sm:$0xff]
      %v1005 = vld [vmem:[%s4 + $0x18] sm:$0xff]
      %v1006 = vld [vmem:[%s4 + $0x20] sm:$0xf]
      %vm1007 = vcmask 293888
      %v1009 = vsel %vm1007, %v1001, 0
      %v1012 = vsel %vm660, %v1006, 0
      %1014 = vmatpush.msra.mxu0 0.0
      %1015 = vmatpush.msra.mxu0 0.0
      %1016 = vmatpush.msra.mxu0 0.0
      %1017 = vmatpush.msra.mxu0 0.0
      %1018 = vmatpush.msra.mxu0 0.0
      %1019 = vmatpush.msra.mxu0 0.0
      %1020 = vmatpush.msra.mxu0 0.0
      %1021 = vmatpush.msra.mxu0 0.0
      %1022 = vmatpush.msra.mxu0 0.0
      %1023 = vmatpush.msra.mxu0 0.0
      %1024 = vmatpush.msra.mxu0 0.0
      %1025 = vmatpush.msra.mxu0 %v1012
      %1026 = vmatpush.msra.mxu0 %v1005
      %1027 = vmatpush.msra.mxu0 %v1004
      %1028 = vmatpush.msra.mxu0 %v1003
      %1029 = vmatpush.msra.mxu0 %v1002
      %1030 = vmatmul.f32.gmra.mxu0 %v1009
      %v1031 = vpop.f32.mrf.mxu0
      %v1032 = vadd.f32 0.0, %v1031
      %1033 = vdwg.mxu0
      %v1034 = vtanh.pop %v1032
      %vm1035 = vcmask 31744
      %1036 = vst.msk [vmem:[%s337] sm:$0xff] %vm1035, %v1034
      %v1037 = vld [vmem:[%s5] sm:$0xf]
      %v1039 = vsel %vm1035, %v1034, 0
      %v1042 = vsel %vm660, %v1037, 0
      %1044 = vmatpush.msra.mxu0 0.0
      %1045 = vmatpush.msra.mxu0 0.0
      %1046 = vmatpush.msra.mxu0 0.0
      %1047 = vmatpush.msra.mxu0 0.0
      %1048 = vmatpush.msra.mxu0 0.0
      %1049 = vmatpush.msra.mxu0 0.0
      %1050 = vmatpush.msra.mxu0 0.0
      %1051 = vmatpush.msra.mxu0 0.0
      %1052 = vmatpush.msra.mxu0 0.0
      %1053 = vmatpush.msra.mxu0 0.0
      %1054 = vmatpush.msra.mxu0 0.0
      %1055 = vmatpush.msra.mxu0 0.0
      %1056 = vmatpush.msra.mxu0 0.0
      %1057 = vmatpush.msra.mxu0 0.0
      %1058 = vmatpush.msra.mxu0 0.0
      %1059 = vmatpush.msra.mxu0 %v1042
      %1060 = vmatmul.f32.gmra.mxu0 %v1039
      %v1061 = vpop.f32.mrf.mxu0
      %v1062 = vadd.f32 0.0, %v1061
      %1063 = vdwg.mxu0
      %v1064 = vld [vmem:[%s1 + $0x18] sm:$0xff]
      %1066 = vrot.lane.b32.xlu0 %v1062, 127
      %v1067 = vpop.permute.xlu0 %1066
      %1069 = vrot.lane.b32.xlu0 %v1062, 48
      %v1070 = vpop.permute.xlu0 %1069
      %v1072 = vsel %vm432, %v1067, %v1070
      %1073 = vrot.lane.b32.xlu0 %v1062, 126
      %v1074 = vpop.permute.xlu0 %1073
      %1076 = vrot.lane.b32.xlu0 %v1062, 47
      %v1077 = vpop.permute.xlu0 %1076
      %vm1079 = vcmask 384000
      %v1080 = vsel %vm1079, %v1074, %v1077
      %1081 = vrot.lane.b32.xlu0 %v1062, 125
      %v1082 = vpop.permute.xlu0 %1081
      %1084 = vrot.lane.b32.xlu0 %v1062, 46
      %v1085 = vpop.permute.xlu0 %1084
      %vm1087 = vcmask 375808
      %v1088 = vsel %vm1087, %v1082, %v1085
      %1089 = vrot.lane.b32.xlu0 %v1062, 121
      %v1090 = vpop.permute.xlu0 %1089
      %1092 = vrot.lane.b32.xlu0 %v1062, 42
      %v1093 = vpop.permute.xlu0 %1092
      %vm1095 = vcmask 343040
      %v1096 = vsel %vm1095, %v1090, %v1093
      %1097 = vrot.lane.b32.xlu0 %v1062, 120
      %v1098 = vpop.permute.xlu0 %1097
      %1100 = vrot.lane.b32.xlu0 %v1062, 41
      %v1101 = vpop.permute.xlu0 %1100
      %vm1103 = vcmask 334848
      %v1104 = vsel %vm1103, %v1098, %v1101
      %1105 = vrot.lane.b32.xlu0 %v1062, 119
      %v1106 = vpop.permute.xlu0 %1105
      %1108 = vrot.lane.b32.xlu0 %v1062, 40
      %v1109 = vpop.permute.xlu0 %1108
      %vm1111 = vcmask 326656
      %v1112 = vsel %vm1111, %v1106, %v1109
      %1113 = vrot.lane.b32.xlu0 %v1062, 118
      %v1114 = vpop.permute.xlu0 %1113
      %1116 = vrot.lane.b32.xlu0 %v1062, 39
      %v1117 = vpop.permute.xlu0 %1116
      %vm1119 = vcmask 318464
      %v1120 = vsel %vm1119, %v1114, %v1117
      %1121 = vrot.lane.b32.xlu0 %v1062, 114
      %v1122 = vpop.permute.xlu0 %1121
      %1124 = vrot.lane.b32.xlu0 %v1062, 35
      %v1125 = vpop.permute.xlu0 %1124
      %v1127 = vsel %vm892, %v1122, %v1125
      %1128 = vrot.lane.b32.xlu0 %v1062, 113
      %v1129 = vpop.permute.xlu0 %1128
      %1131 = vrot.lane.b32.xlu0 %v1062, 34
      %v1132 = vpop.permute.xlu0 %1131
      %v1134 = vsel %vm900, %v1129, %v1132
      %1135 = vrot.lane.b32.xlu0 %v1062, 112
      %v1136 = vpop.permute.xlu0 %1135
      %1138 = vrot.lane.b32.xlu0 %v1062, 33
      %v1139 = vpop.permute.xlu0 %1138
      %vm1141 = vcmask 269312
      %v1142 = vsel %vm1141, %v1136, %v1139
      %1143 = vrot.lane.b32.xlu0 %v1062, 111
      %v1144 = vpop.permute.xlu0 %1143
      %1146 = vrot.lane.b32.xlu0 %v1062, 32
      %v1147 = vpop.permute.xlu0 %1146
      %v1149 = vsel %vm449, %v1144, %v1147
      %1150 = vrot.lane.b32.xlu0 %v1062, 107
      %v1151 = vpop.permute.xlu0 %1150
      %1153 = vrot.lane.b32.xlu0 %v1062, 28
      %v1154 = vpop.permute.xlu0 %1153
      %v1156 = vsel %vm923, %v1151, %v1154
      %1157 = vrot.lane.b32.xlu0 %v1062, 106
      %v1158 = vpop.permute.xlu0 %1157
      %1160 = vrot.lane.b32.xlu0 %v1062, 27
      %v1161 = vpop.permute.xlu0 %1160
      %vm1163 = vcmask 220160
      %v1164 = vsel %vm1163, %v1158, %v1161
      %1165 = vrot.lane.b32.xlu0 %v1062, 105
      %v1166 = vpop.permute.xlu0 %1165
      %1168 = vrot.lane.b32.xlu0 %v1062, 26
      %v1169 = vpop.permute.xlu0 %1168
      %vm1171 = vcmask 211968
      %v1172 = vsel %vm1171, %v1166, %v1169
      %1173 = vrot.lane.b32.xlu0 %v1062, 104
      %v1174 = vpop.permute.xlu0 %1173
      %1176 = vrot.lane.b32.xlu0 %v1062, 25
      %v1177 = vpop.permute.xlu0 %1176
      %vm1179 = vcmask 203776
      %v1180 = vsel %vm1179, %v1174, %v1177
      %v1181 = vld [vmem:[%s1 + $0x30] sm:$0xff]
      %1183 = vset.pattern.permute.xlu0 3
      %1184 = vperm.xlu0 %1183, %v1181
      %v1185 = vpop.permute.xlu0 %1184
      %1187 = vmatpush.msra.mxu0 %v1180
      %1188 = vmatpush.msra.mxu0 %v1172
      %1189 = vmatpush.msra.mxu0 %v1164
      %1190 = vmatpush.msra.mxu0 %v1156
      %1191 = vmatpush.msra.mxu0 %v1149
      %1192 = vmatpush.msra.mxu0 %v1142
      %1193 = vmatpush.msra.mxu0 %v1134
      %1194 = vmatpush.msra.mxu0 %v1127
      %1195 = vmatpush.msra.mxu0 %v1120
      %1196 = vmatpush.msra.mxu0 %v1112
      %1197 = vmatpush.msra.mxu0 %v1104
      %1198 = vmatpush.msra.mxu0 %v1096
      %1199 = vmatpush.msra.mxu0 %v1088
      %1200 = vmatpush.msra.mxu0 %v1080
      %1201 = vmatpush.msra.mxu0 %v1072
      %1202 = vmatpush.msra.mxu0 %v1062
      %1203 = vmatmul.f32.gmra.mxu0 %v1064
      %v1204 = vpop.f32.mrf.mxu0
      %v1205 = vadd.f32 %v1185, %v1204
      %1206 = vdwg.mxu0
      %v1207 = vtanh.pop %v1205
      %v1208 = vld [vmem:[%s6] sm:$0xff]
      %v1209 = vld [vmem:[%s6 + $0x8] sm:$0xff]
      %v1210 = vld [vmem:[%s6 + $0x10] sm:$0xff]
      %v1211 = vld [vmem:[%s6 + $0x18] sm:$0xff]
      %v1212 = vld [vmem:[%s6 + $0x20] sm:$0xff]
      %v1213 = vld [vmem:[%s6 + $0x28] sm:$0xff]
      %v1214 = vld [vmem:[%s6 + $0x30] sm:$0x1]
      %v1216 = vsel %vm415, %v1207, 0
      %vm1218 = vcmask 1040384
      %v1220 = vsel %vm1218, %v1214, 0
      %1222 = vmatpush.msra.mxu0 0.0
      %1223 = vmatpush.msra.mxu0 0.0
      %1224 = vmatpush.msra.mxu0 0.0
      %1225 = vmatpush.msra.mxu0 0.0
      %1226 = vmatpush.msra.mxu0 0.0
      %1227 = vmatpush.msra.mxu0 0.0
      %1228 = vmatpush.msra.mxu0 0.0
      %1229 = vmatpush.msra.mxu0 0.0
      %1230 = vmatpush.msra.mxu0 0.0
      %1231 = vmatpush.msra.mxu0 %v1220
      %1232 = vmatpush.msra.mxu0 %v1213
      %1233 = vmatpush.msra.mxu0 %v1212
      %1234 = vmatpush.msra.mxu0 %v1211
      %1235 = vmatpush.msra.mxu0 %v1210
      %1236 = vmatpush.msra.mxu0 %v1209
      %1237 = vmatpush.msra.mxu0 %v1208
      %1238 = vmatmul.f32.gmra.mxu0 %v1216
      %v1239 = vpop.f32.mrf.mxu0
      %v1240 = vadd.f32 0.0, %v1239
      %1241 = vdwg.mxu0
      %v1242 = vld [vmem:[%s1 + $0x20] sm:$0xff]
      %1244 = vrot.lane.b32.xlu0 %v1240, 127
      %v1245 = vpop.permute.xlu0 %1244
      %1247 = vrot.lane.b32.xlu0 %v1240, 120
      %v1248 = vpop.permute.xlu0 %1247
      %vm1250 = vcmask 982016
      %v1251 = vsel %vm1250, %v1245, %v1248
      %1252 = vrot.lane.b32.xlu0 %v1240, 126
      %v1253 = vpop.permute.xlu0 %1252
      %1255 = vrot.lane.b32.xlu0 %v1240, 119
      %v1256 = vpop.permute.xlu0 %1255
      %vm1258 = vcmask 973824
      %v1259 = vsel %vm1258, %v1253, %v1256
      %1260 = vrot.lane.b32.xlu0 %v1240, 125
      %v1261 = vpop.permute.xlu0 %1260
      %1263 = vrot.lane.b32.xlu0 %v1240, 118
      %v1264 = vpop.permute.xlu0 %1263
      %vm1266 = vcmask 965632
      %v1267 = vsel %vm1266, %v1261, %v1264
      %1268 = vrot.lane.b32.xlu0 %v1240, 117
      %v1269 = vpop.permute.xlu0 %1268
      %1271 = vrot.lane.b32.xlu0 %v1240, 110
      %v1272 = vpop.permute.xlu0 %1271
      %v1274 = vsel %vm389, %v1269, %v1272
      %1275 = vrot.lane.b32.xlu0 %v1240, 116
      %v1276 = vpop.permute.xlu0 %1275
      %1278 = vrot.lane.b32.xlu0 %v1240, 109
      %v1279 = vpop.permute.xlu0 %1278
      %v1281 = vsel %vm406, %v1276, %v1279
      %1282 = vrot.lane.b32.xlu0 %v1240, 115
      %v1283 = vpop.permute.xlu0 %1282
      %1285 = vrot.lane.b32.xlu0 %v1240, 108
      %v1286 = vpop.permute.xlu0 %1285
      %v1288 = vsel %vm423, %v1283, %v1286
      %1289 = vrot.lane.b32.xlu0 %v1240, 114
      %v1290 = vpop.permute.xlu0 %1289
      %1292 = vrot.lane.b32.xlu0 %v1240, 107
      %v1293 = vpop.permute.xlu0 %1292
      %vm1295 = vcmask 875520
      %v1296 = vsel %vm1295, %v1290, %v1293
      %1297 = vrot.lane.b32.xlu0 %v1240, 106
      %v1298 = vpop.permute.xlu0 %1297
      %1300 = vrot.lane.b32.xlu0 %v1240, 99
      %v1301 = vpop.permute.xlu0 %1300
      %v1303 = vsel %vm733, %v1298, %v1301
      %1304 = vrot.lane.b32.xlu0 %v1240, 105
      %v1305 = vpop.permute.xlu0 %1304
      %1307 = vrot.lane.b32.xlu0 %v1240, 98
      %v1308 = vpop.permute.xlu0 %1307
      %v1310 = vsel %vm741, %v1305, %v1308
      %1311 = vrot.lane.b32.xlu0 %v1240, 104
      %v1312 = vpop.permute.xlu0 %1311
      %1314 = vrot.lane.b32.xlu0 %v1240, 97
      %v1315 = vpop.permute.xlu0 %1314
      %vm1317 = vcmask 793600
      %v1318 = vsel %vm1317, %v1312, %v1315
      %1319 = vrot.lane.b32.xlu0 %v1240, 103
      %v1320 = vpop.permute.xlu0 %1319
      %1322 = vrot.lane.b32.xlu0 %v1240, 96
      %v1323 = vpop.permute.xlu0 %1322
      %vm1325 = vcmask 785408
      %v1326 = vsel %vm1325, %v1320, %v1323
      %1327 = vrot.lane.b32.xlu0 %v1240, 95
      %v1328 = vpop.permute.xlu0 %1327
      %1330 = vrot.lane.b32.xlu0 %v1240, 88
      %v1331 = vpop.permute.xlu0 %1330
      %v1333 = vsel %vm764, %v1328, %v1331
      %1334 = vrot.lane.b32.xlu0 %v1240, 94
      %v1335 = vpop.permute.xlu0 %1334
      %1337 = vrot.lane.b32.xlu0 %v1240, 87
      %v1338 = vpop.permute.xlu0 %1337
      %vm1340 = vcmask 711680
      %v1341 = vsel %vm1340, %v1335, %v1338
      %1342 = vrot.lane.b32.xlu0 %v1240, 93
      %v1343 = vpop.permute.xlu0 %1342
      %1345 = vrot.lane.b32.xlu0 %v1240, 86
      %v1346 = vpop.permute.xlu0 %1345
      %vm1348 = vcmask 703488
      %v1349 = vsel %vm1348, %v1343, %v1346
      %1350 = vrot.lane.b32.xlu0 %v1240, 92
      %v1351 = vpop.permute.xlu0 %1350
      %1353 = vrot.lane.b32.xlu0 %v1240, 85
      %v1354 = vpop.permute.xlu0 %1353
      %vm1356 = vcmask 695296
      %v1357 = vsel %vm1356, %v1351, %v1354
      %1358 = vset.pattern.permute.xlu0 4
      %1359 = vperm.xlu0 %1358, %v1181
      %v1360 = vpop.permute.xlu0 %1359
      %1362 = vmatpush.msra.mxu0 %v1357
      %1363 = vmatpush.msra.mxu0 %v1349
      %1364 = vmatpush.msra.mxu0 %v1341
      %1365 = vmatpush.msra.mxu0 %v1333
      %1366 = vmatpush.msra.mxu0 %v1326
      %1367 = vmatpush.msra.mxu0 %v1318
      %1368 = vmatpush.msra.mxu0 %v1310
      %1369 = vmatpush.msra.mxu0 %v1303
      %1370 = vmatpush.msra.mxu0 %v1296
      %1371 = vmatpush.msra.mxu0 %v1288
      %1372 = vmatpush.msra.mxu0 %v1281
      %1373 = vmatpush.msra.mxu0 %v1274
      %1374 = vmatpush.msra.mxu0 %v1267
      %1375 = vmatpush.msra.mxu0 %v1259
      %1376 = vmatpush.msra.mxu0 %v1251
      %1377 = vmatpush.msra.mxu0 %v1240
      %1378 = vmatmul.f32.gmra.mxu0 %v1242
      %v1379 = vpop.f32.mrf.mxu0
      %v1380 = vadd.f32 %v1360, %v1379
      %1381 = vdwg.mxu0
      %v1382 = vtanh.pop %v1380
      %v1383 = vld [vmem:[%s7] sm:$0xff]
      %v1384 = vld [vmem:[%s7 + $0x8] sm:$0xff]
      %v1385 = vld [vmem:[%s7 + $0x10] sm:$0xff]
      %v1386 = vld [vmem:[%s7 + $0x18] sm:$0xff]
      %v1387 = vld [vmem:[%s7 + $0x20] sm:$0xff]
      %v1388 = vld [vmem:[%s7 + $0x28] sm:$0xff]
      %v1389 = vld [vmem:[%s7 + $0x30] sm:$0xff]
      %v1390 = vld [vmem:[%s7 + $0x38] sm:$0xff]
      %v1391 = vld [vmem:[%s7 + $0x40] sm:$0xff]
      %v1392 = vld [vmem:[%s7 + $0x48] sm:$0xff]
      %v1393 = vld [vmem:[%s7 + $0x50] sm:$0xff]
      %v1394 = vld [vmem:[%s7 + $0x58] sm:$0xff]
      %v1395 = vld [vmem:[%s7 + $0x60] sm:$0xff]
      %v1396 = vld [vmem:[%s7 + $0x68] sm:$0xff]
      %v1397 = vld [vmem:[%s7 + $0x70] sm:$0xff]
      %v1398 = vld [vmem:[%s7 + $0x78] sm:$0xff]
      %v1399 = vld [vmem:[%s7 + $0x80] sm:$0xff]
      %v1400 = vld [vmem:[%s7 + $0x88] sm:$0xff]
      %v1401 = vld [vmem:[%s7 + $0x90] sm:$0xff]
      %v1402 = vld [vmem:[%s7 + $0x98] sm:$0xff]
      %v1403 = vld [vmem:[%s7 + $0xa0] sm:$0xff]
      %v1404 = vld [vmem:[%s7 + $0xa8] sm:$0xff]
      %v1405 = vld [vmem:[%s7 + $0xb0] sm:$0xff]
      %v1406 = vld [vmem:[%s7 + $0xb8] sm:$0xff]
      %v1407 = vld [vmem:[%s7 + $0xc0] sm:$0xff]
      %v1408 = vld [vmem:[%s7 + $0xc8] sm:$0xff]
      %v1409 = vld [vmem:[%s7 + $0xd0] sm:$0xff]
      %v1410 = vld [vmem:[%s7 + $0xd8] sm:$0xff]
      %v1411 = vld [vmem:[%s7 + $0xe0] sm:$0xff]
      %v1412 = vld [vmem:[%s7 + $0xe8] sm:$0xff]
      %v1413 = vld [vmem:[%s7 + $0xf0] sm:$0xff]
      %v1414 = vld [vmem:[%s7 + $0xf8] sm:$0xff]
      %v1415 = vld [vmem:[%s7 + $0x100] sm:$0xff]
      %v1416 = vld [vmem:[%s7 + $0x108] sm:$0xff]
      %v1417 = vld [vmem:[%s7 + $0x110] sm:$0xff]
      %v1418 = vld [vmem:[%s7 + $0x118] sm:$0xff]
      %v1419 = vld [vmem:[%s7 + $0x120] sm:$0xff]
      %v1420 = vld [vmem:[%s7 + $0x128] sm:$0xff]
      %v1421 = vld [vmem:[%s7 + $0x130] sm:$0xff]
      %v1422 = vld [vmem:[%s7 + $0x138] sm:$0xff]
      %v1423 = vld [vmem:[%s7 + $0x140] sm:$0xff]
      %v1424 = vld [vmem:[%s7 + $0x148] sm:$0xff]
      %v1425 = vld [vmem:[%s7 + $0x150] sm:$0xff]
      %v1426 = vld [vmem:[%s7 + $0x158] sm:$0xff]
      %v1427 = vld [vmem:[%s7 + $0x160] sm:$0xff]
      %v1428 = vld [vmem:[%s7 + $0x168] sm:$0x1]
      %v1429 = vld [vmem:[%s7 + $0x170] sm:$0x1]
      %v1430 = vld [vmem:[%s7 + $0x178] sm:$0x1]
      %vm1431 = vcmask 990208
      %v1433 = vsel %vm1431, %v1382, 0
      %v1436 = vsel %vm1218, %v1428, 0
      %v1439 = vsel %vm1218, %v1429, 0
      %v1442 = vsel %vm1218, %v1430, 0
      %1444 = vmatpush.msra.mxu0 %v1436
      %1445 = vmatpush.msra.mxu0 %v1425
      %1446 = vmatpush.msra.mxu0 %v1422
      %1447 = vmatpush.msra.mxu0 %v1419
      %1448 = vmatpush.msra.mxu0 %v1416
      %1449 = vmatpush.msra.mxu0 %v1413
      %1450 = vmatpush.msra.mxu0 %v1410
      %1451 = vmatpush.msra.mxu0 %v1407
      %1452 = vmatpush.msra.mxu0 %v1404
      %1453 = vmatpush.msra.mxu0 %v1401
      %1454 = vmatpush.msra.mxu0 %v1398
      %1455 = vmatpush.msra.mxu0 %v1395
      %1456 = vmatpush.msra.mxu0 %v1392
      %1457 = vmatpush.msra.mxu0 %v1389
      %1458 = vmatpush.msra.mxu0 %v1386
      %1459 = vmatpush.msra.mxu0 %v1383
      %1460 = vmatmul.f32.gmra.mxu0 %v1433
      %v1461 = vpop.f32.mrf.mxu0
      %v1462 = vadd.f32 0.0, %v1461
      %1463 = vdwg.mxu0
      %1464 = vmatpush.msra.mxu0 %v1439
      %1465 = vmatpush.msra.mxu0 %v1426
      %1466 = vmatpush.msra.mxu0 %v1423
      %1467 = vmatpush.msra.mxu0 %v1420
      %1468 = vmatpush.msra.mxu0 %v1417
      %1469 = vmatpush.msra.mxu0 %v1414
      %1470 = vmatpush.msra.mxu0 %v1411
      %1471 = vmatpush.msra.mxu0 %v1408
      %1472 = vmatpush.msra.mxu0 %v1405
      %1473 = vmatpush.msra.mxu0 %v1402
      %1474 = vmatpush.msra.mxu0 %v1399
      %1475 = vmatpush.msra.mxu0 %v1396
      %1476 = vmatpush.msra.mxu0 %v1393
      %1477 = vmatpush.msra.mxu0 %v1390
      %1478 = vmatpush.msra.mxu0 %v1387
      %1479 = vmatpush.msra.mxu0 %v1384
      %1480 = vmatmul.f32.gmra.mxu0 %v1433
      %v1481 = vpop.f32.mrf.mxu0
      %v1482 = vadd.f32 0.0, %v1481
      %1483 = vdwg.mxu0
      %1484 = vmatpush.msra.mxu0 %v1442
      %1485 = vmatpush.msra.mxu0 %v1427
      %1486 = vmatpush.msra.mxu0 %v1424
      %1487 = vmatpush.msra.mxu0 %v1421
      %1488 = vmatpush.msra.mxu0 %v1418
      %1489 = vmatpush.msra.mxu0 %v1415
      %1490 = vmatpush.msra.mxu0 %v1412
      %1491 = vmatpush.msra.mxu0 %v1409
      %1492 = vmatpush.msra.mxu0 %v1406
      %1493 = vmatpush.msra.mxu0 %v1403
      %1494 = vmatpush.msra.mxu0 %v1400
      %1495 = vmatpush.msra.mxu0 %v1397
      %1496 = vmatpush.msra.mxu0 %v1394
      %1497 = vmatpush.msra.mxu0 %v1391
      %1498 = vmatpush.msra.mxu0 %v1388
      %1499 = vmatpush.msra.mxu0 %v1385
      %1500 = vmatmul.f32.gmra.mxu0 %v1433
      %v1501 = vpop.f32.mrf.mxu0
      %v1502 = vadd.f32 0.0, %v1501
      %1503 = vdwg.mxu0
      %v1504 = vld [vmem:[%s1 + $0x28] ss:$0 sm:$0xff]
      %1508 = vrot.lane.b32.xlu0 %v1462, 127
      %v1509 = vpop.permute.xlu0 %1508
      %1510 = vrot.lane.b32.xlu0 %v1482, 127
      %v1511 = vpop.permute.xlu0 %1510
      %1512 = vrot.lane.b32.xlu0 %v1502, 127
      %v1513 = vpop.permute.xlu0 %1512
      %v1514 = vsel %vm355, %v1509, %v1511
      %v1515 = vsel %vm355, %v1511, %v1513
      %1519 = vrot.lane.b32.xlu0 %v1462, 104
      %v1520 = vpop.permute.xlu0 %1519
      %vm1522 = vcmask 850944
      %v1523 = vsel %vm1522, %v1513, %v1520
      %1524 = vrot.lane.b32.xlu0 %v1462, 126
      %v1525 = vpop.permute.xlu0 %1524
      %1526 = vrot.lane.b32.xlu0 %v1482, 126
      %v1527 = vpop.permute.xlu0 %1526
      %1528 = vrot.lane.b32.xlu0 %v1502, 126
      %v1529 = vpop.permute.xlu0 %1528
      %v1530 = vsel %vm372, %v1525, %v1527
      %v1531 = vsel %vm372, %v1527, %v1529
      %1535 = vrot.lane.b32.xlu0 %v1462, 103
      %v1536 = vpop.permute.xlu0 %1535
      %vm1538 = vcmask 842752
      %v1539 = vsel %vm1538, %v1529, %v1536
      %1540 = vrot.lane.b32.xlu0 %v1462, 109
      %v1541 = vpop.permute.xlu0 %1540
      %1542 = vrot.lane.b32.xlu0 %v1482, 109
      %v1543 = vpop.permute.xlu0 %1542
      %1544 = vrot.lane.b32.xlu0 %v1502, 109
      %v1545 = vpop.permute.xlu0 %1544
      %v1546 = vsel %vm406, %v1541, %v1543
      %v1547 = vsel %vm406, %v1543, %v1545
      %1551 = vrot.lane.b32.xlu0 %v1462, 86
      %v1552 = vpop.permute.xlu0 %1551
      %v1554 = vsel %vm1348, %v1545, %v1552
      %1555 = vrot.lane.b32.xlu0 %v1462, 108
      %v1556 = vpop.permute.xlu0 %1555
      %1557 = vrot.lane.b32.xlu0 %v1482, 108
      %v1558 = vpop.permute.xlu0 %1557
      %1559 = vrot.lane.b32.xlu0 %v1502, 108
      %v1560 = vpop.permute.xlu0 %1559
      %v1561 = vsel %vm423, %v1556, %v1558
      %v1562 = vsel %vm423, %v1558, %v1560
      %1566 = vrot.lane.b32.xlu0 %v1462, 85
      %v1567 = vpop.permute.xlu0 %1566
      %v1569 = vsel %vm1356, %v1560, %v1567
      %1570 = vrot.lane.b32.xlu0 %v1462, 107
      %v1571 = vpop.permute.xlu0 %1570
      %1572 = vrot.lane.b32.xlu0 %v1482, 107
      %v1573 = vpop.permute.xlu0 %1572
      %1574 = vrot.lane.b32.xlu0 %v1502, 107
      %v1575 = vpop.permute.xlu0 %1574
      %v1576 = vsel %vm1295, %v1571, %v1573
      %v1577 = vsel %vm1295, %v1573, %v1575
      %1581 = vrot.lane.b32.xlu0 %v1462, 84
      %v1582 = vpop.permute.xlu0 %1581
      %vm1584 = vcmask 687104
      %v1585 = vsel %vm1584, %v1575, %v1582
      %1586 = vrot.lane.b32.xlu0 %v1462, 90
      %v1587 = vpop.permute.xlu0 %1586
      %1588 = vrot.lane.b32.xlu0 %v1482, 90
      %v1589 = vpop.permute.xlu0 %1588
      %1590 = vrot.lane.b32.xlu0 %v1502, 90
      %v1591 = vpop.permute.xlu0 %1590
      %v1592 = vsel %vm474, %v1587, %v1589
      %v1593 = vsel %vm474, %v1589, %v1591
      %1597 = vrot.lane.b32.xlu0 %v1462, 67
      %v1598 = vpop.permute.xlu0 %1597
      %v1600 = vsel %vm364, %v1591, %v1598
      %1601 = vrot.lane.b32.xlu0 %v1462, 89
      %v1602 = vpop.permute.xlu0 %1601
      %1603 = vrot.lane.b32.xlu0 %v1482, 89
      %v1604 = vpop.permute.xlu0 %1603
      %1605 = vrot.lane.b32.xlu0 %v1502, 89
      %v1606 = vpop.permute.xlu0 %1605
      %v1607 = vsel %vm756, %v1602, %v1604
      %v1608 = vsel %vm756, %v1604, %v1606
      %1612 = vrot.lane.b32.xlu0 %v1462, 66
      %v1613 = vpop.permute.xlu0 %1612
      %v1615 = vsel %vm381, %v1606, %v1613
      %1616 = vrot.lane.b32.xlu0 %v1462, 88
      %v1617 = vpop.permute.xlu0 %1616
      %1618 = vrot.lane.b32.xlu0 %v1482, 88
      %v1619 = vpop.permute.xlu0 %1618
      %1620 = vrot.lane.b32.xlu0 %v1502, 88
      %v1621 = vpop.permute.xlu0 %1620
      %v1622 = vsel %vm764, %v1617, %v1619
      %v1623 = vsel %vm764, %v1619, %v1621
      %1627 = vrot.lane.b32.xlu0 %v1462, 65
      %v1628 = vpop.permute.xlu0 %1627
      %vm1630 = vcmask 531456
      %v1631 = vsel %vm1630, %v1621, %v1628
      %v1632 = vld [vmem:[%s1 + $0x30] ss:$0 sm:$0xff]
      %1634 = vset.pattern.permute.xlu0 5
      %1635 = vperm.xlu0 %1634, %v1632
      %v1636 = vpop.permute.xlu0 %1635
      %v1639 = vsel %vm485, %v1504, 0
      %1641 = vmatpush.msra.mxu0 0.0
      %1642 = vmatpush.msra.mxu0 0.0
      %1643 = vmatpush.msra.mxu0 0.0
      %1644 = vmatpush.msra.mxu0 0.0
      %1645 = vmatpush.msra.mxu0 0.0
      %1646 = vmatpush.msra.mxu0 0.0
      %1647 = vmatpush.msra.mxu0 0.0
      %1648 = vmatpush.msra.mxu0 %v1622
      %1649 = vmatpush.msra.mxu0 %v1607
      %1650 = vmatpush.msra.mxu0 %v1592
      %1651 = vmatpush.msra.mxu0 %v1576
      %1652 = vmatpush.msra.mxu0 %v1561
      %1653 = vmatpush.msra.mxu0 %v1546
      %1654 = vmatpush.msra.mxu0 %v1530
      %1655 = vmatpush.msra.mxu0 %v1514
      %1656 = vmatpush.msra.mxu0 %v1462
      %1657 = vmatmul.f32.gmra.mxu0 %v1639
      %v1658 = vpop.f32.mrf.mxu0
      %v1659 = vadd.f32 %v1636, %v1658
      %1660 = vdwg.mxu0
      %1661 = vmatpush.msra.mxu0 0.0
      %1662 = vmatpush.msra.mxu0 0.0
      %1663 = vmatpush.msra.mxu0 0.0
      %1664 = vmatpush.msra.mxu0 0.0
      %1665 = vmatpush.msra.mxu0 0.0
      %1666 = vmatpush.msra.mxu0 0.0
      %1667 = vmatpush.msra.mxu0 0.0
      %1668 = vmatpush.msra.mxu0 %v1623
      %1669 = vmatpush.msra.mxu0 %v1608
      %1670 = vmatpush.msra.mxu0 %v1593
      %1671 = vmatpush.msra.mxu0 %v1577
      %1672 = vmatpush.msra.mxu0 %v1562
      %1673 = vmatpush.msra.mxu0 %v1547
      %1674 = vmatpush.msra.mxu0 %v1531
      %1675 = vmatpush.msra.mxu0 %v1515
      %1676 = vmatpush.msra.mxu0 %v1482
      %1677 = vmatmul.f32.gmra.mxu0 %v1639
      %v1678 = vpop.f32.mrf.mxu0
      %v1679 = vadd.f32 %v1636, %v1678
      %1680 = vdwg.mxu0
      %1681 = vmatpush.msra.mxu0 0.0
      %1682 = vmatpush.msra.mxu0 0.0
      %1683 = vmatpush.msra.mxu0 0.0
      %1684 = vmatpush.msra.mxu0 0.0
      %1685 = vmatpush.msra.mxu0 0.0
      %1686 = vmatpush.msra.mxu0 0.0
      %1687 = vmatpush.msra.mxu0 0.0
      %1688 = vmatpush.msra.mxu0 %v1631
      %1689 = vmatpush.msra.mxu0 %v1615
      %1690 = vmatpush.msra.mxu0 %v1600
      %1691 = vmatpush.msra.mxu0 %v1585
      %1692 = vmatpush.msra.mxu0 %v1569
      %1693 = vmatpush.msra.mxu0 %v1554
      %1694 = vmatpush.msra.mxu0 %v1539
      %1695 = vmatpush.msra.mxu0 %v1523
      %1696 = vmatpush.msra.mxu0 %v1502
      %1697 = vmatmul.f32.gmra.mxu0 %v1639
      %v1698 = vpop.f32.mrf.mxu0
      %v1699 = vadd.f32 %v1636, %v1698
      %1700 = vdwg.mxu0
      %v1704 = vrot.slane %v1679, 7
      %v1705 = vrot.slane %v1699, 6
      %v1706 = vsel %vm1218, %v1659, %v1704
      %vm1707 = vcmask 1041408
      %v1708 = vsel %vm1707, %v1706, %v1705
      %v1710 = vlaneseq
      %vm1711 = vcmp.ge.s32.totalorder %v1710, 0
      %vm1712 = vcmp.lt.s32.totalorder %v1710, 361
      %vm1713 = vmand %vm1711, %vm1712
      %1714 = vst.msk [vmem:[%s341] sm:$0x7] %vm1713, %v1708
      %p1715 = scmp.lt.s32.totalorder %s21, 1
      %s1716 = scalar_select %p1715, %s21, 1
      %s1717 = smul.addr %s1716, 8
      %s1718 = scalar_lea.vmem %s8, %s1717
      %p1719 = scmp.lt.s32.totalorder %s21, 1
      %s1720 = scalar_select %p1719, %s21, 1
      %s1721 = smul.addr %s1720, 3
      %s1722 = scalar_lea.vmem %s9, %s1721
      // Predicated region
      $region53: #{cnn_forward.1} parent=51 // pred_check
        %p1723 = pneg %p212
      $region54: #{cnn_forward.1} parent=51 // pred_check_branch
        %1725 = sbr.rel (%p1723) target = $region56
      $region55: #{cnn_forward.1} parent=51 // pred_region
        _
      $region56: #{cnn_forward.1} parent=51 // pred_fallthru
        _
      // Predicated region
      $region57: #{cnn_forward.1} parent=51 // pred_check
        %p1726 = pneg %p238
      $region58: #{cnn_forward.1} parent=51 // pred_check_branch
        %1728 = sbr.rel (%p1726) target = $region60
      $region59: #{cnn_forward.1} parent=51 // pred_region
        _
      $region60: #{cnn_forward.1} parent=51 // pred_fallthru
        _
    $region52: #{cnn_forward.1} parent=5 // pred_fallthru
      _
    %p1729 = scmp.le.s32.totalorder 2, %s16
    // Predicated region
    $region61: #{cnn_forward.1} parent=5 // pred_check
      %p1730 = pneg %p1729
    $region62: #{cnn_forward.1} parent=5 // pred_check_branch
      %1732 = sbr.rel (%p1730) target = $region64
    $region63: #{cnn_forward.1} parent=5 // pred_region
      %s1733 = ssub.s32 %s16, 2
      // Predicated region
      $region65: #{cnn_forward.1} parent=63 // pred_check
        %p1734 = pneg %p218
      $region66: #{cnn_forward.1} parent=63 // pred_check_branch
        %1736 = sbr.rel (%p1734) target = $region68
      $region67: #{cnn_forward.1} parent=63 // pred_region
        %p1737 = scmp.lt.s32.totalorder %s22, 1
        %s1738 = scalar_select %p1737, %s22, 1
        %s1739 = smul.addr %s1738, 8
        %s1740 = scalar_lea.vmem %s8, %s1739
      $region68: #{cnn_forward.1} parent=63 // pred_fallthru
        _
      // Predicated region
      $region69: #{cnn_forward.1} parent=63 // pred_check
        %p1741 = pneg %p244
      $region70: #{cnn_forward.1} parent=63 // pred_check_branch
        %1743 = sbr.rel (%p1741) target = $region72
      $region71: #{cnn_forward.1} parent=63 // pred_region
        %p1744 = scmp.lt.s32.totalorder %s22, 1
        %s1745 = scalar_select %p1744, %s22, 1
        %s1746 = smul.addr %s1745, 3
        %s1747 = scalar_lea.vmem %s9, %s1746
      $region72: #{cnn_forward.1} parent=63 // pred_fallthru
        _
    $region64: #{cnn_forward.1} parent=5 // pred_fallthru
      _
  $region6: #{cnn_forward.1} parent=0 // loop_footer
    %s20 = sadd.s32 1, %s16
  $region7: #{cnn_forward.1} parent=0 // loop_footer_branch
    %15 = sbr.rel target = $region3
  $region8: #{cnn_forward.1} parent=0 // loop_exit
    _

</llo_original>
